<compile_context>
chip_gen: v7x
topology: tpu7x:2x2x1
jax: 0.10.0
libtpu: 0.0.40
codegen_flags: <defaults>
</compile_context>

<pallas_src>
import jax
import jax.numpy as jnp
from jax import lax
from jax.experimental import pallas as pl
from jax.experimental.pallas import tpu as pltpu


# ---------------------------------------------------------------------------
# Pallas kernels
# ---------------------------------------------------------------------------
def _conv_relu_pool_kernel(p_ref, w_ref, b_ref, o_ref):
    """Fused conv-as-matmul + bias + ReLU + 2x2 maxpool.

    p_ref : (4, K, tq)  four 2x2-window phases of the im2col patch matrix
    w_ref : (Cout, K)   conv weight, rows=Cout, cols ordered (kh, kw, cin)
    b_ref : (Cout, 1)   conv bias
    o_ref : (Cout, tq)  pooled output block, columns ordered (b, hp, wp)
    """
    w = w_ref[...]
    m = jnp.dot(w, p_ref[0], preferred_element_type=jnp.float32)
    for q in range(1, 4):
        m = jnp.maximum(
            m, jnp.dot(w, p_ref[q], preferred_element_type=jnp.float32))
    # maxpool(relu(conv + b)) == relu(max_q(conv_q) + b): bias/ReLU after max.
    o_ref[...] = jnp.maximum(m + b_ref[...], 0.0).astype(o_ref.dtype)


def _mlp_kernel(x_ref, w1_ref, b1_ref, w2_ref, b2_ref, w3_ref, b3_ref, o_ref):
    """fc1 -> ReLU -> fc2 -> ReLU -> fc3, weights resident in VMEM."""
    h = jnp.dot(x_ref[...], w1_ref[...], preferred_element_type=jnp.float32)
    h = jnp.maximum(h + b1_ref[...], 0.0)
    h = jnp.dot(h, w2_ref[...], preferred_element_type=jnp.float32)
    h = jnp.maximum(h + b2_ref[...], 0.0)
    h = jnp.dot(h, w3_ref[...], preferred_element_type=jnp.float32)
    o_ref[...] = (h + b3_ref[...]).astype(o_ref.dtype)


# ---------------------------------------------------------------------------
# Glue: phase-split im2col (tiny XLA slicing / stacking, fused by XLA)
# ---------------------------------------------------------------------------
def _pooled_patches(x_cf, k):
    """Build the phase-split im2col patch tensor.

    x_cf : (Cin, B, H, W) channel-first activations.
    Returns (P, Hp, Wp) with P of shape (4, Cin*k*k, B*Hp*Wp): phase (p, r) of
    the leading axis holds the patches for conv output positions
    (ho = 2*hp + p, wo = 2*wp + r); rows ordered (kh, kw, cin), columns
    ordered (b, hp, wp).
    """
    Cin, B, H, W = x_cf.shape
    Ho, Wo = H - k + 1, W - k + 1
    Hp, Wp = Ho // 2, Wo // 2
    phases = []
    for p in (0, 1):
        for r in (0, 1):
            slabs = []
            for di in range(k):
                for dj in range(k):
                    s = x_cf[:, :,
                             p + di:p + di + 2 * Hp:2,
                             r + dj:r + dj + 2 * Wp:2]      # (Cin, B, Hp, Wp)
                    slabs.append(s)
            q = jnp.stack(slabs, axis=0)                    # (k*k, Cin, B, Hp, Wp)
            phases.append(q.reshape(k * k * Cin, B * Hp * Wp))
    return jnp.stack(phases, axis=0), Hp, Wp                # (4, K, Q)


# ---------------------------------------------------------------------------
# Wrappers
# ---------------------------------------------------------------------------
def conv_relu_pool(x_cf, w, b, *, col_tile=512):
    """Fused Conv2d(VALID, stride 1) + ReLU + MaxPool2d(2, 2).

    x_cf : (Cin, B, H, W) channel-first.  w : (Cout, Cin, k, k).  b : (Cout,).
    Returns ((Cout, B*Hp*Wp) pooled activations, columns (b, hp, wp), Hp, Wp).
    """
    Cin, B, H, W = x_cf.shape
    Cout, _, k, _ = w.shape
    P, Hp, Wp = _pooled_patches(x_cf, k)
    K = Cin * k * k
    Q = B * Hp * Wp
    # Reorder tiny weight to (kh, kw, cin) columns to match the patch rows.
    w2 = jnp.transpose(w, (0, 2, 3, 1)).reshape(Cout, K)
    b2 = b.reshape(Cout, 1)

    tq = Q if Q <= col_tile else col_tile     # batch-independent VMEM footprint
    grid = (pl.cdiv(Q, tq),)
    out = pl.pallas_call(
        _conv_relu_pool_kernel,
        out_shape=jax.ShapeDtypeStruct((Cout, Q), jnp.float32),
        grid=grid,
        in_specs=[
            pl.BlockSpec((4, K, tq), lambda i: (0, 0, i)),
            pl.BlockSpec((Cout, K), lambda i: (0, 0)),
            pl.BlockSpec((Cout, 1), lambda i: (0, 0)),
        ],
        out_specs=pl.BlockSpec((Cout, tq), lambda i: (0, i)),
        compiler_params=pltpu.CompilerParams(
            dimension_semantics=("parallel",)),
    )(P, w2, b2)
    return out, Hp, Wp


def mlp_fused(x, w1, b1, w2, b2, w3, b3, *, batch_tile=256):
    """x: (B, K); w_i are PyTorch (out, in) Linear weights. Fused 3-layer MLP."""
    B, K = x.shape
    N1, N2, N3 = w1.shape[0], w2.shape[0], w3.shape[0]
    tb = B if B <= batch_tile else batch_tile
    grid = (pl.cdiv(B, tb),)
    return pl.pallas_call(
        _mlp_kernel,
        out_shape=jax.ShapeDtypeStruct((B, N3), jnp.float32),
        grid=grid,
        in_specs=[
            pl.BlockSpec((tb, K), lambda i: (i, 0)),
            pl.BlockSpec((K, N1), lambda i: (0, 0)),
            pl.BlockSpec((1, N1), lambda i: (0, 0)),
            pl.BlockSpec((N1, N2), lambda i: (0, 0)),
            pl.BlockSpec((1, N2), lambda i: (0, 0)),
            pl.BlockSpec((N2, N3), lambda i: (0, 0)),
            pl.BlockSpec((1, N3), lambda i: (0, 0)),
        ],
        out_specs=pl.BlockSpec((tb, N3), lambda i: (i, 0)),
        compiler_params=pltpu.CompilerParams(
            dimension_semantics=("parallel",)),
    )(x, w1.T, b1.reshape(1, N1), w2.T, b2.reshape(1, N2),
      w3.T, b3.reshape(1, N3))


# ---------------------------------------------------------------------------
# Full forward pass (mirrors LeNet5.forward)
# ---------------------------------------------------------------------------
@jax.jit
def lenet5_forward(params, x):
    # x: (B, 1, 28, 28) NCHW float32 (PyTorch layout)
    B = x.shape[0]
    x_cf = jnp.transpose(x, (1, 0, 2, 3))                        # (1, B, 28, 28)
    h, hp, wp = conv_relu_pool(x_cf, params["conv1_w"], params["conv1_b"])
    h = h.reshape(params["conv1_w"].shape[0], B, hp, wp)         # (6, B, 12, 12)
    h, hp, wp = conv_relu_pool(h, params["conv2_w"], params["conv2_b"])
    c2 = params["conv2_w"].shape[0]                              # 16
    # flatten to PyTorch's x.view(B, -1) order over (C, H, W) — tiny reorder.
    flat = h.reshape(c2, B, hp * wp).transpose(1, 0, 2).reshape(B, c2 * hp * wp)
    return mlp_fused(flat, params["fc1_w"], params["fc1_b"],
                     params["fc2_w"], params["fc2_b"],
                     params["fc3_w"], params["fc3_b"])


# ---------------------------------------------------------------------------
# Deterministic parameter init (PyTorch-style uniform(-1/sqrt(fan_in), ...))
# ---------------------------------------------------------------------------
def init_params(key):
    ks = jax.random.split(key, 10)

    def rnd(k, shape, fan_in):
        bound = 1.0 / float(fan_in) ** 0.5
        return jax.random.uniform(k, shape, jnp.float32, -bound, bound)

    return {
        "conv1_w": rnd(ks[0], (6, 1, 5, 5), 1 * 25),
        "conv1_b": rnd(ks[1], (6,), 1 * 25),
        "conv2_w": rnd(ks[2], (16, 6, 5, 5), 6 * 25),
        "conv2_b": rnd(ks[3], (16,), 6 * 25),
        "fc1_w": rnd(ks[4], (120, 16 * 4 * 4), 16 * 4 * 4),
        "fc1_b": rnd(ks[5], (120,), 16 * 4 * 4),
        "fc2_w": rnd(ks[6], (84, 120), 120),
        "fc2_b": rnd(ks[7], (84,), 120),
        "fc3_w": rnd(ks[8], (10, 84), 84),
        "fc3_b": rnd(ks[9], (10,), 84),
    }


# ---------------------------------------------------------------------------
# Plain-JAX reference (op-for-op mirror of the PyTorch module) for self-check
# ---------------------------------------------------------------------------
def lenet5_reference(params, x):
    hi = lax.Precision.HIGHEST

    def conv(x, w, b):
        y = lax.conv_general_dilated(
            x, w, (1, 1), "VALID",
            dimension_numbers=("NCHW", "OIHW", "NCHW"), precision=hi)
        return y + b.reshape(1, -1, 1, 1)

    def pool(x):
        return lax.reduce_window(x, -jnp.inf, lax.max,
                                 (1, 1, 2, 2), (1, 1, 2, 2), "VALID")

    x = pool(jax.nn.relu(conv(x, params["conv1_w"], params["conv1_b"])))
    x = pool(jax.nn.relu(conv(x, params["conv2_w"], params["conv2_b"])))
    x = x.reshape(x.shape[0], -1)
    x = jax.nn.relu(jnp.dot(x, params["fc1_w"].T, precision=hi) + params["fc1_b"])
    x = jax.nn.relu(jnp.dot(x, params["fc2_w"].T, precision=hi) + params["fc2_b"])
    return jnp.dot(x, params["fc3_w"].T, precision=hi) + params["fc3_b"]


if __name__ == "__main__":
    key = jax.random.PRNGKey(0)
    pkey, xkey = jax.random.split(key)
    params = init_params(pkey)
    # LeNet5's fc1 (16*4*4) implies a 28x28 single-channel input.
    x = jax.random.normal(xkey, (2, 1, 28, 28), dtype=jnp.float32)

    out = jax.block_until_ready(lenet5_forward(params, x))
    assert out.shape == (2, 10) and out.dtype == jnp.float32

    ref = jax.block_until_ready(lenet5_reference(params, x))
    max_err = float(jnp.max(jnp.abs(out - ref)))
    assert jnp.allclose(out, ref, atol=1e-2, rtol=1e-2), f"max abs err {max_err}"

    print("KERNEL_OK")
</pallas_src>

<mosaic_0001>
module attributes {stable_mosaic.version = 11 : i64} {
  func.func @_conv_relu_pool_kernel(%arg0: i32, %arg1: memref<4x25x288xf32, #tpu.memory_space<vmem>>, %arg2: memref<6x25xf32, #tpu.memory_space<vmem>>, %arg3: memref<6x1xf32, #tpu.memory_space<vmem>>, %arg4: memref<6x288xf32, #tpu.memory_space<vmem>>) attributes {dimension_semantics = [#tpu.dimension_semantics<parallel>], iteration_bounds = array<i64: 1>, scalar_prefetch = 0 : i64, scratch_operands = 0 : i64, tpu.core_type = #tpu.core_type<tc>, window_params = [{transform_indices = @transform_0, window_bounds = array<i64: 4, 25, 288>}, {pipeline_mode = #tpu.pipeline_mode<synchronous>, transform_indices = @transform_1, window_bounds = array<i64: 6, 25>}, {pipeline_mode = #tpu.pipeline_mode<synchronous>, transform_indices = @transform_2, window_bounds = array<i64: 6, 1>}, {transform_indices = @transform_3, window_bounds = array<i64: 6, 288>}]} {
    %c0 = arith.constant 0 : index
    %c0_0 = arith.constant 0 : index
    %0 = vector.load %arg2[%c0, %c0_0] : memref<6x25xf32, #tpu.memory_space<vmem>>, vector<6x25xf32>
    %c0_1 = arith.constant 0 : index
    %c0_2 = arith.constant 0 : index
    %c0_3 = arith.constant 0 : index
    %1 = vector.load %arg1[%c0_1, %c0_2, %c0_3] : memref<4x25x288xf32, #tpu.memory_space<vmem>>, vector<1x25x288xf32>
    %2 = vector.shape_cast %1 : vector<1x25x288xf32> to vector<25x288xf32>
    %cst = arith.constant dense<0.000000e+00> : vector<6x288xf32>
    %3 = tpu.matmul %0, %2, %cst {dimension_numbers = #tpu.dot_dimension_numbers<[1], [0], [0], [1], [0, 0, 1, 1], [], []>} : vector<6x25xf32>, vector<25x288xf32>, vector<6x288xf32> -> vector<6x288xf32>
    %c1 = arith.constant 1 : index
    %c0_4 = arith.constant 0 : index
    %c0_5 = arith.constant 0 : index
    %4 = vector.load %arg1[%c1, %c0_4, %c0_5] : memref<4x25x288xf32, #tpu.memory_space<vmem>>, vector<1x25x288xf32>
    %5 = vector.shape_cast %4 : vector<1x25x288xf32> to vector<25x288xf32>
    %cst_6 = arith.constant dense<0.000000e+00> : vector<6x288xf32>
    %6 = tpu.matmul %0, %5, %cst_6 {dimension_numbers = #tpu.dot_dimension_numbers<[1], [0], [0], [1], [0, 0, 1, 1], [], []>} : vector<6x25xf32>, vector<25x288xf32>, vector<6x288xf32> -> vector<6x288xf32>
    %7 = arith.maximumf %3, %6 : vector<6x288xf32>
    %c2 = arith.constant 2 : index
    %c0_7 = arith.constant 0 : index
    %c0_8 = arith.constant 0 : index
    %8 = vector.load %arg1[%c2, %c0_7, %c0_8] : memref<4x25x288xf32, #tpu.memory_space<vmem>>, vector<1x25x288xf32>
    %9 = vector.shape_cast %8 : vector<1x25x288xf32> to vector<25x288xf32>
    %cst_9 = arith.constant dense<0.000000e+00> : vector<6x288xf32>
    %10 = tpu.matmul %0, %9, %cst_9 {dimension_numbers = #tpu.dot_dimension_numbers<[1], [0], [0], [1], [0, 0, 1, 1], [], []>} : vector<6x25xf32>, vector<25x288xf32>, vector<6x288xf32> -> vector<6x288xf32>
    %11 = arith.maximumf %7, %10 : vector<6x288xf32>
    %c3 = arith.constant 3 : index
    %c0_10 = arith.constant 0 : index
    %c0_11 = arith.constant 0 : index
    %12 = vector.load %arg1[%c3, %c0_10, %c0_11] : memref<4x25x288xf32, #tpu.memory_space<vmem>>, vector<1x25x288xf32>
    %13 = vector.shape_cast %12 : vector<1x25x288xf32> to vector<25x288xf32>
    %cst_12 = arith.constant dense<0.000000e+00> : vector<6x288xf32>
    %14 = tpu.matmul %0, %13, %cst_12 {dimension_numbers = #tpu.dot_dimension_numbers<[1], [0], [0], [1], [0, 0, 1, 1], [], []>} : vector<6x25xf32>, vector<25x288xf32>, vector<6x288xf32> -> vector<6x288xf32>
    %15 = arith.maximumf %11, %14 : vector<6x288xf32>
    %c0_13 = arith.constant 0 : index
    %c0_14 = arith.constant 0 : index
    %16 = vector.load %arg3[%c0_13, %c0_14] : memref<6x1xf32, #tpu.memory_space<vmem>>, vector<6x1xf32>
    %17 = vector.broadcast %16 : vector<6x1xf32> to vector<6x288xf32>
    %18 = arith.addf %15, %17 : vector<6x288xf32>
    %cst_15 = arith.constant 0.000000e+00 : f32
    %19 = vector.broadcast %cst_15 : f32 to vector<6x288xf32>
    %20 = arith.maximumf %18, %19 : vector<6x288xf32>
    %c0_16 = arith.constant 0 : index
    %c0_17 = arith.constant 0 : index
    %21 = vector.load %arg4[%c0_16, %c0_17] : memref<6x288xf32, #tpu.memory_space<vmem>>, vector<6x288xf32>
    tpu.vector_store %arg4[%c0_16, %c0_17], %20 {strides = array<i32>} : memref<6x288xf32, #tpu.memory_space<vmem>>, vector<6x288xf32>,
    return
  }
  func.func @transform_0(%arg0: i32) -> (i32, i32, i32) {
    %c0_i32 = arith.constant 0 : i32
    %c0_i32_0 = arith.constant 0 : i32
    %c0_i32_1 = arith.constant 0 : i32
    return %c0_i32, %c0_i32_0, %arg0 : i32, i32, i32
  }
  func.func @transform_1(%arg0: i32) -> (i32, i32) {
    %c0_i32 = arith.constant 0 : i32
    %c0_i32_0 = arith.constant 0 : i32
    %c0_i32_1 = arith.constant 0 : i32
    return %c0_i32, %c0_i32_0 : i32, i32
  }
  func.func @transform_2(%arg0: i32) -> (i32, i32) {
    %c0_i32 = arith.constant 0 : i32
    %c0_i32_0 = arith.constant 0 : i32
    %c0_i32_1 = arith.constant 0 : i32
    return %c0_i32, %c0_i32_0 : i32, i32
  }
  func.func @transform_3(%arg0: i32) -> (i32, i32) {
    %c0_i32 = arith.constant 0 : i32
    %c0_i32_0 = arith.constant 0 : i32
    return %c0_i32, %arg0 : i32, i32
  }
}

module attributes {stable_mosaic.version = 11 : i64} {
  func.func @_conv_relu_pool_kernel(%arg0: i32, %arg1: memref<4x150x32xf32, #tpu.memory_space<vmem>>, %arg2: memref<16x150xf32, #tpu.memory_space<vmem>>, %arg3: memref<16x1xf32, #tpu.memory_space<vmem>>, %arg4: memref<16x32xf32, #tpu.memory_space<vmem>>) attributes {dimension_semantics = [#tpu.dimension_semantics<parallel>], iteration_bounds = array<i64: 1>, scalar_prefetch = 0 : i64, scratch_operands = 0 : i64, tpu.core_type = #tpu.core_type<tc>, window_params = [{transform_indices = @transform_0, window_bounds = array<i64: 4, 150, 32>}, {pipeline_mode = #tpu.pipeline_mode<synchronous>, transform_indices = @transform_1, window_bounds = array<i64: 16, 150>}, {pipeline_mode = #tpu.pipeline_mode<synchronous>, transform_indices = @transform_2, window_bounds = array<i64: 16, 1>}, {transform_indices = @transform_3, window_bounds = array<i64: 16, 32>}]} {
    %c0 = arith.constant 0 : index
    %c0_0 = arith.constant 0 : index
    %0 = vector.load %arg2[%c0, %c0_0] : memref<16x150xf32, #tpu.memory_space<vmem>>, vector<16x150xf32>
    %c0_1 = arith.constant 0 : index
    %c0_2 = arith.constant 0 : index
    %c0_3 = arith.constant 0 : index
    %1 = vector.load %arg1[%c0_1, %c0_2, %c0_3] : memref<4x150x32xf32, #tpu.memory_space<vmem>>, vector<1x150x32xf32>
    %2 = vector.shape_cast %1 : vector<1x150x32xf32> to vector<150x32xf32>
    %cst = arith.constant dense<0.000000e+00> : vector<16x32xf32>
    %3 = tpu.matmul %0, %2, %cst {dimension_numbers = #tpu.dot_dimension_numbers<[1], [0], [0], [1], [0, 0, 1, 1], [], []>} : vector<16x150xf32>, vector<150x32xf32>, vector<16x32xf32> -> vector<16x32xf32>
    %c1 = arith.constant 1 : index
    %c0_4 = arith.constant 0 : index
    %c0_5 = arith.constant 0 : index
    %4 = vector.load %arg1[%c1, %c0_4, %c0_5] : memref<4x150x32xf32, #tpu.memory_space<vmem>>, vector<1x150x32xf32>
    %5 = vector.shape_cast %4 : vector<1x150x32xf32> to vector<150x32xf32>
    %cst_6 = arith.constant dense<0.000000e+00> : vector<16x32xf32>
    %6 = tpu.matmul %0, %5, %cst_6 {dimension_numbers = #tpu.dot_dimension_numbers<[1], [0], [0], [1], [0, 0, 1, 1], [], []>} : vector<16x150xf32>, vector<150x32xf32>, vector<16x32xf32> -> vector<16x32xf32>
    %7 = arith.maximumf %3, %6 : vector<16x32xf32>
    %c2 = arith.constant 2 : index
    %c0_7 = arith.constant 0 : index
    %c0_8 = arith.constant 0 : index
    %8 = vector.load %arg1[%c2, %c0_7, %c0_8] : memref<4x150x32xf32, #tpu.memory_space<vmem>>, vector<1x150x32xf32>
    %9 = vector.shape_cast %8 : vector<1x150x32xf32> to vector<150x32xf32>
    %cst_9 = arith.constant dense<0.000000e+00> : vector<16x32xf32>
    %10 = tpu.matmul %0, %9, %cst_9 {dimension_numbers = #tpu.dot_dimension_numbers<[1], [0], [0], [1], [0, 0, 1, 1], [], []>} : vector<16x150xf32>, vector<150x32xf32>, vector<16x32xf32> -> vector<16x32xf32>
    %11 = arith.maximumf %7, %10 : vector<16x32xf32>
    %c3 = arith.constant 3 : index
    %c0_10 = arith.constant 0 : index
    %c0_11 = arith.constant 0 : index
    %12 = vector.load %arg1[%c3, %c0_10, %c0_11] : memref<4x150x32xf32, #tpu.memory_space<vmem>>, vector<1x150x32xf32>
    %13 = vector.shape_cast %12 : vector<1x150x32xf32> to vector<150x32xf32>
    %cst_12 = arith.constant dense<0.000000e+00> : vector<16x32xf32>
    %14 = tpu.matmul %0, %13, %cst_12 {dimension_numbers = #tpu.dot_dimension_numbers<[1], [0], [0], [1], [0, 0, 1, 1], [], []>} : vector<16x150xf32>, vector<150x32xf32>, vector<16x32xf32> -> vector<16x32xf32>
    %15 = arith.maximumf %11, %14 : vector<16x32xf32>
    %c0_13 = arith.constant 0 : index
    %c0_14 = arith.constant 0 : index
    %16 = vector.load %arg3[%c0_13, %c0_14] : memref<16x1xf32, #tpu.memory_space<vmem>>, vector<16x1xf32>
    %17 = vector.broadcast %16 : vector<16x1xf32> to vector<16x32xf32>
    %18 = arith.addf %15, %17 : vector<16x32xf32>
    %cst_15 = arith.constant 0.000000e+00 : f32
    %19 = vector.broadcast %cst_15 : f32 to vector<16x32xf32>
    %20 = arith.maximumf %18, %19 : vector<16x32xf32>
    %c0_16 = arith.constant 0 : index
    %c0_17 = arith.constant 0 : index
    %21 = vector.load %arg4[%c0_16, %c0_17] : memref<16x32xf32, #tpu.memory_space<vmem>>, vector<16x32xf32>
    tpu.vector_store %arg4[%c0_16, %c0_17], %20 {strides = array<i32>} : memref<16x32xf32, #tpu.memory_space<vmem>>, vector<16x32xf32>,
    return
  }
  func.func @transform_0(%arg0: i32) -> (i32, i32, i32) {
    %c0_i32 = arith.constant 0 : i32
    %c0_i32_0 = arith.constant 0 : i32
    %c0_i32_1 = arith.constant 0 : i32
    return %c0_i32, %c0_i32_0, %arg0 : i32, i32, i32
  }
  func.func @transform_1(%arg0: i32) -> (i32, i32) {
    %c0_i32 = arith.constant 0 : i32
    %c0_i32_0 = arith.constant 0 : i32
    %c0_i32_1 = arith.constant 0 : i32
    return %c0_i32, %c0_i32_0 : i32, i32
  }
  func.func @transform_2(%arg0: i32) -> (i32, i32) {
    %c0_i32 = arith.constant 0 : i32
    %c0_i32_0 = arith.constant 0 : i32
    %c0_i32_1 = arith.constant 0 : i32
    return %c0_i32, %c0_i32_0 : i32, i32
  }
  func.func @transform_3(%arg0: i32) -> (i32, i32) {
    %c0_i32 = arith.constant 0 : i32
    %c0_i32_0 = arith.constant 0 : i32
    return %c0_i32, %arg0 : i32, i32
  }
}

module attributes {stable_mosaic.version = 11 : i64} {
  func.func @_mlp_kernel(%arg0: i32, %arg1: memref<2x256xf32, #tpu.memory_space<vmem>>, %arg2: memref<256x120xf32, #tpu.memory_space<vmem>>, %arg3: memref<1x120xf32, #tpu.memory_space<vmem>>, %arg4: memref<120x84xf32, #tpu.memory_space<vmem>>, %arg5: memref<1x84xf32, #tpu.memory_space<vmem>>, %arg6: memref<84x10xf32, #tpu.memory_space<vmem>>, %arg7: memref<1x10xf32, #tpu.memory_space<vmem>>, %arg8: memref<2x10xf32, #tpu.memory_space<vmem>>) attributes {dimension_semantics = [#tpu.dimension_semantics<parallel>], iteration_bounds = array<i64: 1>, scalar_prefetch = 0 : i64, scratch_operands = 0 : i64, tpu.core_type = #tpu.core_type<tc>, window_params = [{transform_indices = @transform_0, window_bounds = array<i64: 2, 256>}, {pipeline_mode = #tpu.pipeline_mode<synchronous>, transform_indices = @transform_1, window_bounds = array<i64: 256, 120>}, {pipeline_mode = #tpu.pipeline_mode<synchronous>, transform_indices = @transform_2, window_bounds = array<i64: 1, 120>}, {pipeline_mode = #tpu.pipeline_mode<synchronous>, transform_indices = @transform_3, window_bounds = array<i64: 120, 84>}, {pipeline_mode = #tpu.pipeline_mode<synchronous>, transform_indices = @transform_4, window_bounds = array<i64: 1, 84>}, {pipeline_mode = #tpu.pipeline_mode<synchronous>, transform_indices = @transform_5, window_bounds = array<i64: 84, 10>}, {pipeline_mode = #tpu.pipeline_mode<synchronous>, transform_indices = @transform_6, window_bounds = array<i64: 1, 10>}, {transform_indices = @transform_7, window_bounds = array<i64: 2, 10>}]} {
    %c0 = arith.constant 0 : index
    %c0_0 = arith.constant 0 : index
    %0 = vector.load %arg1[%c0, %c0_0] : memref<2x256xf32, #tpu.memory_space<vmem>>, vector<2x256xf32>
    %c0_1 = arith.constant 0 : index
    %c0_2 = arith.constant 0 : index
    %1 = vector.load %arg2[%c0_1, %c0_2] : memref<256x120xf32, #tpu.memory_space<vmem>>, vector<256x120xf32>
    %cst = arith.constant dense<0.000000e+00> : vector<2x120xf32>
    %2 = tpu.matmul %0, %1, %cst {dimension_numbers = #tpu.dot_dimension_numbers<[1], [0], [0], [1], [0, 0, 1, 1], [], []>} : vector<2x256xf32>, vector<256x120xf32>, vector<2x120xf32> -> vector<2x120xf32>
    %c0_3 = arith.constant 0 : index
    %c0_4 = arith.constant 0 : index
    %3 = vector.load %arg3[%c0_3, %c0_4] : memref<1x120xf32, #tpu.memory_space<vmem>>, vector<1x120xf32>
    %4 = vector.broadcast %3 : vector<1x120xf32> to vector<2x120xf32>
    %5 = arith.addf %2, %4 : vector<2x120xf32>
    %cst_5 = arith.constant 0.000000e+00 : f32
    %6 = vector.broadcast %cst_5 : f32 to vector<2x120xf32>
    %7 = arith.maximumf %5, %6 : vector<2x120xf32>
    %c0_6 = arith.constant 0 : index
    %c0_7 = arith.constant 0 : index
    %8 = vector.load %arg4[%c0_6, %c0_7] : memref<120x84xf32, #tpu.memory_space<vmem>>, vector<120x84xf32>
    %cst_8 = arith.constant dense<0.000000e+00> : vector<2x84xf32>
    %9 = tpu.matmul %7, %8, %cst_8 {dimension_numbers = #tpu.dot_dimension_numbers<[1], [0], [0], [1], [0, 0, 1, 1], [], []>} : vector<2x120xf32>, vector<120x84xf32>, vector<2x84xf32> -> vector<2x84xf32>
    %c0_9 = arith.constant 0 : index
    %c0_10 = arith.constant 0 : index
    %10 = vector.load %arg5[%c0_9, %c0_10] : memref<1x84xf32, #tpu.memory_space<vmem>>, vector<1x84xf32>
    %11 = vector.broadcast %10 : vector<1x84xf32> to vector<2x84xf32>
    %12 = arith.addf %9, %11 : vector<2x84xf32>
    %cst_11 = arith.constant 0.000000e+00 : f32
    %13 = vector.broadcast %cst_11 : f32 to vector<2x84xf32>
    %14 = arith.maximumf %12, %13 : vector<2x84xf32>
    %c0_12 = arith.constant 0 : index
    %c0_13 = arith.constant 0 : index
    %15 = vector.load %arg6[%c0_12, %c0_13] : memref<84x10xf32, #tpu.memory_space<vmem>>, vector<84x10xf32>
    %cst_14 = arith.constant dense<0.000000e+00> : vector<2x10xf32>
    %16 = tpu.matmul %14, %15, %cst_14 {dimension_numbers = #tpu.dot_dimension_numbers<[1], [0], [0], [1], [0, 0, 1, 1], [], []>} : vector<2x84xf32>, vector<84x10xf32>, vector<2x10xf32> -> vector<2x10xf32>
    %c0_15 = arith.constant 0 : index
    %c0_16 = arith.constant 0 : index
    %17 = vector.load %arg7[%c0_15, %c0_16] : memref<1x10xf32, #tpu.memory_space<vmem>>, vector<1x10xf32>
    %18 = vector.broadcast %17 : vector<1x10xf32> to vector<2x10xf32>
    %19 = arith.addf %16, %18 : vector<2x10xf32>
    %c0_17 = arith.constant 0 : index
    %c0_18 = arith.constant 0 : index
    %20 = vector.load %arg8[%c0_17, %c0_18] : memref<2x10xf32, #tpu.memory_space<vmem>>, vector<2x10xf32>
    tpu.vector_store %arg8[%c0_17, %c0_18], %19 {strides = array<i32>} : memref<2x10xf32, #tpu.memory_space<vmem>>, vector<2x10xf32>,
    return
  }
  func.func @transform_0(%arg0: i32) -> (i32, i32) {
    %c0_i32 = arith.constant 0 : i32
    %c0_i32_0 = arith.constant 0 : i32
    return %arg0, %c0_i32 : i32, i32
  }
  func.func @transform_1(%arg0: i32) -> (i32, i32) {
    %c0_i32 = arith.constant 0 : i32
    %c0_i32_0 = arith.constant 0 : i32
    %c0_i32_1 = arith.constant 0 : i32
    return %c0_i32, %c0_i32_0 : i32, i32
  }
  func.func @transform_2(%arg0: i32) -> (i32, i32) {
    %c0_i32 = arith.constant 0 : i32
    %c0_i32_0 = arith.constant 0 : i32
    %c0_i32_1 = arith.constant 0 : i32
    return %c0_i32, %c0_i32_0 : i32, i32
  }
  func.func @transform_3(%arg0: i32) -> (i32, i32) {
    %c0_i32 = arith.constant 0 : i32
    %c0_i32_0 = arith.constant 0 : i32
    %c0_i32_1 = arith.constant 0 : i32
    return %c0_i32, %c0_i32_0 : i32, i32
  }
  func.func @transform_4(%arg0: i32) -> (i32, i32) {
    %c0_i32 = arith.constant 0 : i32
    %c0_i32_0 = arith.constant 0 : i32
    %c0_i32_1 = arith.constant 0 : i32
    return %c0_i32, %c0_i32_0 : i32, i32
  }
  func.func @transform_5(%arg0: i32) -> (i32, i32) {
    %c0_i32 = arith.constant 0 : i32
    %c0_i32_0 = arith.constant 0 : i32
    %c0_i32_1 = arith.constant 0 : i32
    return %c0_i32, %c0_i32_0 : i32, i32
  }
  func.func @transform_6(%arg0: i32) -> (i32, i32) {
    %c0_i32 = arith.constant 0 : i32
    %c0_i32_0 = arith.constant 0 : i32
    %c0_i32_1 = arith.constant 0 : i32
    return %c0_i32, %c0_i32_0 : i32, i32
  }
  func.func @transform_7(%arg0: i32) -> (i32, i32) {
    %c0_i32 = arith.constant 0 : i32
    %c0_i32_0 = arith.constant 0 : i32
    return %arg0, %c0_i32 : i32, i32
  }
}

</mosaic_0001>

<llo_original>
// kernel: lenet5_forward.3
$region0: #{lenet5_forward.3}
  #allocation0 [shape = 'u32[]', space=smem, size = 0x4, offset = 0x4, fixed_abs, tag = 'smem constant byte address 0x4 - core index']
  #allocation1 [shape = 'u32[144,128]{1,0:T(1,128)}', space=vmem, size = 0x12000, scoped, tag = 'internal scratch']
  %s0 = inlined_call_operand.vmem [shape: f32[4,25,288], index: 0, kind: input, shape index: {}]
  %s1 = inlined_call_operand.vmem [shape: f32[6,25], index: 1, kind: input, shape index: {}]
  %s2 = inlined_call_operand.vmem [shape: f32[6,1], index: 2, kind: input, shape index: {}]
  %s3 = inlined_call_operand.vmem [shape: f32[6,288], index: 3, kind: output, shape index: {}]
  %s4 = sld [smem:[#allocation0]]
  $region22: #{lenet5_forward.3} parent=0
    _
  %s6 = ssub.s32 1, %s4
  %s7 = scalar_select 0, %s6, %s4
  // Predicated region
  $region2: #{lenet5_forward.3} parent=0 // pred_check
    _
  $region3: #{lenet5_forward.3} parent=0 // pred_check_branch
    %9 = sbr.rel (0) target = $region5
  $region4: #{lenet5_forward.3} parent=0 // pred_region
    _
  $region5: #{lenet5_forward.3} parent=0 // pred_fallthru
    _
  // Predicated region
  $region6: #{lenet5_forward.3} parent=0 // pred_check
    _
  $region7: #{lenet5_forward.3} parent=0 // pred_check_branch
    %11 = sbr.rel (0) target = $region9
  $region8: #{lenet5_forward.3} parent=0 // pred_region
    _
  $region9: #{lenet5_forward.3} parent=0 // pred_fallthru
    _
  // Predicated region
  $region10: #{lenet5_forward.3} parent=0 // pred_check
    _
  $region11: #{lenet5_forward.3} parent=0 // pred_check_branch
    %13 = sbr.rel (0) target = $region13
  $region12: #{lenet5_forward.3} parent=0 // pred_region
    _
  $region13: #{lenet5_forward.3} parent=0 // pred_fallthru
    _
  %v14 = vld [vmem:[%s1] sm:$0x3f]
  %v15 = vld [vmem:[%s0] sm:$0xff]
  %v16 = vld [vmem:[%s0 + $0x8] sm:$0xff]
  %v17 = vld [vmem:[%s0 + $0x10] sm:$0xff]
  %v18 = vld [vmem:[%s0 + $0x18] sm:$0xff]
  %v19 = vld [vmem:[%s0 + $0x20] sm:$0xff]
  %v20 = vld [vmem:[%s0 + $0x28] sm:$0xff]
  %v21 = vld [vmem:[%s0 + $0x30] sm:$0xff]
  %v22 = vld [vmem:[%s0 + $0x38] sm:$0xff]
  %v23 = vld [vmem:[%s0 + $0x40] sm:$0xff]
  %v24 = vld [vmem:[%s0 + $0x48] sm:$0x1]
  %v25 = vld [vmem:[%s0 + $0x50] sm:$0x1]
  %v26 = vld [vmem:[%s0 + $0x58] sm:$0x1]
  %vm27 = vcmask 203776
  %v29 = vsel %vm27, %v14, 0
  %vm31 = vcmask 1040384
  %v33 = vsel %vm31, %v24, 0
  %v36 = vsel %vm31, %v25, 0
  %v39 = vsel %vm31, %v26, 0
  %41 = vmatprep.subr.mxu0 %v16
  %42 = vmatpush1.msra.mxu0 %v15
  %43 = vmatprep.subr.mxu0 %v19
  %44 = vmatpush1.msra.mxu0 %v18
  %45 = vmatprep.subr.mxu0 %v22
  %46 = vmatpush1.msra.mxu0 %v21
  %47 = vmatprep.subr.mxu0 %v36
  %48 = vmatpush1.msra.mxu0 %v33
  %49 = vmatprep.subr.mxu0 0.0
  %50 = vmatpush1.msra.mxu0 0.0
  %51 = vmatprep.subr.mxu0 0.0
  %52 = vmatpush1.msra.mxu0 0.0
  %53 = vmatprep.subr.mxu0 0.0
  %54 = vmatpush1.msra.mxu0 0.0
  %55 = vmatprep.subr.mxu0 0.0
  %56 = vmatpush1.msra.mxu0 0.0
  %57 = vmatprep.subr.mxu0 0.0
  %58 = vmatpush1.msra.mxu0 0.0
  %59 = vmatprep.subr.mxu0 0.0
  %60 = vmatpush1.msra.mxu0 0.0
  %61 = vmatprep.subr.mxu0 0.0
  %62 = vmatpush1.msra.mxu0 0.0
  %63 = vmatprep.subr.mxu0 0.0
  %64 = vmatpush1.msra.mxu0 0.0
  %65 = vmatprep.subr.mxu0 0.0
  %66 = vmatpush1.msra.mxu0 0.0
  %67 = vmatprep.subr.mxu0 0.0
  %68 = vmatpush1.msra.mxu0 0.0
  %69 = vmatprep.subr.mxu0 0.0
  %70 = vmatpush1.msra.mxu0 0.0
  %71 = vmatprep.subr.mxu0 0.0
  %72 = vmatpush1.msra.mxu0 0.0
  %73 = vmatprep.subr.mxu0 0.0
  %74 = vmatpush1.msra.mxu0 0.0
  %75 = vmatprep.subr.mxu0 0.0
  %76 = vmatpush1.msra.mxu0 0.0
  %77 = vmatprep.subr.mxu0 0.0
  %78 = vmatpush1.msra.mxu0 0.0
  %79 = vmatprep.subr.mxu0 0.0
  %80 = vmatpush1.msra.mxu0 0.0
  %81 = vmatprep.subr.mxu0 0.0
  %82 = vmatpush1.msra.mxu0 0.0
  %83 = vmatprep.subr.mxu0 0.0
  %84 = vmatpush1.msra.mxu0 0.0
  %85 = vmatprep.subr.mxu0 0.0
  %86 = vmatpush1.msra.mxu0 0.0
  %87 = vmatprep.subr.mxu0 0.0
  %88 = vmatpush1.msra.mxu0 0.0
  %89 = vmatprep.subr.mxu0 0.0
  %90 = vmatpush1.msra.mxu0 0.0
  %91 = vmatprep.subr.mxu0 0.0
  %92 = vmatpush1.msra.mxu0 0.0
  %93 = vmatprep.subr.mxu0 0.0
  %94 = vmatpush1.msra.mxu0 0.0
  %95 = vmatprep.subr.mxu0 0.0
  %96 = vmatpush1.msra.mxu0 0.0
  %97 = vmatprep.subr.mxu0 0.0
  %98 = vmatpush1.msra.mxu0 0.0
  %99 = vmatprep.subr.mxu0 0.0
  %100 = vmatpush1.msra.mxu0 0.0
  %101 = vmatprep.subr.mxu0 0.0
  %102 = vmatpush1.msra.mxu0 0.0
  %103 = vmatprep.subr.mxu0 0.0
  %104 = vmatpush1.msra.mxu0 0.0
  %105 = vmatprep.mubr.f32.mxu0 0.0
  %106 = vmatmul.mubr.f32.gmra.mrb[0].mxu0 %v29
  %v107 = vpop.f32.mrb[0].mxu0
  %v108 = vadd.f32 0.0, %v107
  %v109 = vpop.f32.mrb[0].mxu0
  %v110 = vadd.f32 0.0, %v109
  %111 = vdwg.mxu0
  %112 = vmatprep.subr.mxu0 0.0
  %113 = vmatpush1.msra.mxu0 %v17
  %114 = vmatprep.subr.mxu0 0.0
  %115 = vmatpush1.msra.mxu0 %v20
  %116 = vmatprep.subr.mxu0 0.0
  %117 = vmatpush1.msra.mxu0 %v23
  %118 = vmatprep.subr.mxu0 0.0
  %119 = vmatpush1.msra.mxu0 %v39
  %120 = vmatprep.subr.mxu0 0.0
  %121 = vmatpush1.msra.mxu0 0.0
  %122 = vmatprep.subr.mxu0 0.0
  %123 = vmatpush1.msra.mxu0 0.0
  %124 = vmatprep.subr.mxu0 0.0
  %125 = vmatpush1.msra.mxu0 0.0
  %126 = vmatprep.subr.mxu0 0.0
  %127 = vmatpush1.msra.mxu0 0.0
  %128 = vmatprep.subr.mxu0 0.0
  %129 = vmatpush1.msra.mxu0 0.0
  %130 = vmatprep.subr.mxu0 0.0
  %131 = vmatpush1.msra.mxu0 0.0
  %132 = vmatprep.subr.mxu0 0.0
  %133 = vmatpush1.msra.mxu0 0.0
  %134 = vmatprep.subr.mxu0 0.0
  %135 = vmatpush1.msra.mxu0 0.0
  %136 = vmatprep.subr.mxu0 0.0
  %137 = vmatpush1.msra.mxu0 0.0
  %138 = vmatprep.subr.mxu0 0.0
  %139 = vmatpush1.msra.mxu0 0.0
  %140 = vmatprep.subr.mxu0 0.0
  %141 = vmatpush1.msra.mxu0 0.0
  %142 = vmatprep.subr.mxu0 0.0
  %143 = vmatpush1.msra.mxu0 0.0
  %144 = vmatprep.subr.mxu0 0.0
  %145 = vmatpush1.msra.mxu0 0.0
  %146 = vmatprep.subr.mxu0 0.0
  %147 = vmatpush1.msra.mxu0 0.0
  %148 = vmatprep.subr.mxu0 0.0
  %149 = vmatpush1.msra.mxu0 0.0
  %150 = vmatprep.subr.mxu0 0.0
  %151 = vmatpush1.msra.mxu0 0.0
  %152 = vmatprep.subr.mxu0 0.0
  %153 = vmatpush1.msra.mxu0 0.0
  %154 = vmatprep.subr.mxu0 0.0
  %155 = vmatpush1.msra.mxu0 0.0
  %156 = vmatprep.subr.mxu0 0.0
  %157 = vmatpush1.msra.mxu0 0.0
  %158 = vmatprep.subr.mxu0 0.0
  %159 = vmatpush1.msra.mxu0 0.0
  %160 = vmatprep.subr.mxu0 0.0
  %161 = vmatpush1.msra.mxu0 0.0
  %162 = vmatprep.subr.mxu0 0.0
  %163 = vmatpush1.msra.mxu0 0.0
  %164 = vmatprep.subr.mxu0 0.0
  %165 = vmatpush1.msra.mxu0 0.0
  %166 = vmatprep.subr.mxu0 0.0
  %167 = vmatpush1.msra.mxu0 0.0
  %168 = vmatprep.subr.mxu0 0.0
  %169 = vmatpush1.msra.mxu0 0.0
  %170 = vmatprep.subr.mxu0 0.0
  %171 = vmatpush1.msra.mxu0 0.0
  %172 = vmatprep.subr.mxu0 0.0
  %173 = vmatpush1.msra.mxu0 0.0
  %174 = vmatprep.subr.mxu0 0.0
  %175 = vmatpush1.msra.mxu0 0.0
  %176 = vmatprep.mubr.f32.mxu0 0.0
  %177 = vmatmul.mubr.f32.gmra.mrb[0].mxu0 %v29
  %v178 = vpop.f32.mrb[0].mxu0
  %v179 = vadd.f32 0.0, %v178
  %v180 = vpop.f32.mrb[0].mxu0
  %181 = vdwg.mxu0
  %s182 = scalar_lea.vmem %s0, 96
  %v183 = vld [vmem:[%s182] sm:$0xff]
  %v184 = vld [vmem:[%s182 + $0x8] sm:$0xff]
  %v185 = vld [vmem:[%s182 + $0x10] sm:$0xff]
  %v186 = vld [vmem:[%s182 + $0x18] sm:$0xff]
  %v187 = vld [vmem:[%s182 + $0x20] sm:$0xff]
  %v188 = vld [vmem:[%s182 + $0x28] sm:$0xff]
  %v189 = vld [vmem:[%s182 + $0x30] sm:$0xff]
  %v190 = vld [vmem:[%s182 + $0x38] sm:$0xff]
  %v191 = vld [vmem:[%s182 + $0x40] sm:$0xff]
  %v192 = vld [vmem:[%s182 + $0x48] sm:$0x1]
  %v193 = vld [vmem:[%s182 + $0x50] sm:$0x1]
  %v194 = vld [vmem:[%s182 + $0x58] sm:$0x1]
  %v196 = vsel %vm31, %v192, 0
  %v199 = vsel %vm31, %v193, 0
  %v202 = vsel %vm31, %v194, 0
  %204 = vmatprep.subr.mxu0 %v184
  %205 = vmatpush1.msra.mxu0 %v183
  %206 = vmatprep.subr.mxu0 %v187
  %207 = vmatpush1.msra.mxu0 %v186
  %208 = vmatprep.subr.mxu0 %v190
  %209 = vmatpush1.msra.mxu0 %v189
  %210 = vmatprep.subr.mxu0 %v199
  %211 = vmatpush1.msra.mxu0 %v196
  %212 = vmatprep.subr.mxu0 0.0
  %213 = vmatpush1.msra.mxu0 0.0
  %214 = vmatprep.subr.mxu0 0.0
  %215 = vmatpush1.msra.mxu0 0.0
  %216 = vmatprep.subr.mxu0 0.0
  %217 = vmatpush1.msra.mxu0 0.0
  %218 = vmatprep.subr.mxu0 0.0
  %219 = vmatpush1.msra.mxu0 0.0
  %220 = vmatprep.subr.mxu0 0.0
  %221 = vmatpush1.msra.mxu0 0.0
  %222 = vmatprep.subr.mxu0 0.0
  %223 = vmatpush1.msra.mxu0 0.0
  %224 = vmatprep.subr.mxu0 0.0
  %225 = vmatpush1.msra.mxu0 0.0
  %226 = vmatprep.subr.mxu0 0.0
  %227 = vmatpush1.msra.mxu0 0.0
  %228 = vmatprep.subr.mxu0 0.0
  %229 = vmatpush1.msra.mxu0 0.0
  %230 = vmatprep.subr.mxu0 0.0
  %231 = vmatpush1.msra.mxu0 0.0
  %232 = vmatprep.subr.mxu0 0.0
  %233 = vmatpush1.msra.mxu0 0.0
  %234 = vmatprep.subr.mxu0 0.0
  %235 = vmatpush1.msra.mxu0 0.0
  %236 = vmatprep.subr.mxu0 0.0
  %237 = vmatpush1.msra.mxu0 0.0
  %238 = vmatprep.subr.mxu0 0.0
  %239 = vmatpush1.msra.mxu0 0.0
  %240 = vmatprep.subr.mxu0 0.0
  %241 = vmatpush1.msra.mxu0 0.0
  %242 = vmatprep.subr.mxu0 0.0
  %243 = vmatpush1.msra.mxu0 0.0
  %244 = vmatprep.subr.mxu0 0.0
  %245 = vmatpush1.msra.mxu0 0.0
  %246 = vmatprep.subr.mxu0 0.0
  %247 = vmatpush1.msra.mxu0 0.0
  %248 = vmatprep.subr.mxu0 0.0
  %249 = vmatpush1.msra.mxu0 0.0
  %250 = vmatprep.subr.mxu0 0.0
  %251 = vmatpush1.msra.mxu0 0.0
  %252 = vmatprep.subr.mxu0 0.0
  %253 = vmatpush1.msra.mxu0 0.0
  %254 = vmatprep.subr.mxu0 0.0
  %255 = vmatpush1.msra.mxu0 0.0
  %256 = vmatprep.subr.mxu0 0.0
  %257 = vmatpush1.msra.mxu0 0.0
  %258 = vmatprep.subr.mxu0 0.0
  %259 = vmatpush1.msra.mxu0 0.0
  %260 = vmatprep.subr.mxu0 0.0
  %261 = vmatpush1.msra.mxu0 0.0
  %262 = vmatprep.subr.mxu0 0.0
  %263 = vmatpush1.msra.mxu0 0.0
  %264 = vmatprep.subr.mxu0 0.0
  %265 = vmatpush1.msra.mxu0 0.0
  %266 = vmatprep.subr.mxu0 0.0
  %267 = vmatpush1.msra.mxu0 0.0
  %268 = vmatprep.mubr.f32.mxu0 0.0
  %269 = vmatmul.mubr.f32.gmra.mrb[0].mxu0 %v29
  %v270 = vpop.f32.mrb[0].mxu0
  %v271 = vadd.f32 0.0, %v270
  %v272 = vpop.f32.mrb[0].mxu0
  %v273 = vadd.f32 0.0, %v272
  %274 = vdwg.mxu0
  %275 = vmatprep.subr.mxu0 0.0
  %276 = vmatpush1.msra.mxu0 %v185
  %277 = vmatprep.subr.mxu0 0.0
  %278 = vmatpush1.msra.mxu0 %v188
  %279 = vmatprep.subr.mxu0 0.0
  %280 = vmatpush1.msra.mxu0 %v191
  %281 = vmatprep.subr.mxu0 0.0
  %282 = vmatpush1.msra.mxu0 %v202
  %283 = vmatprep.subr.mxu0 0.0
  %284 = vmatpush1.msra.mxu0 0.0
  %285 = vmatprep.subr.mxu0 0.0
  %286 = vmatpush1.msra.mxu0 0.0
  %287 = vmatprep.subr.mxu0 0.0
  %288 = vmatpush1.msra.mxu0 0.0
  %289 = vmatprep.subr.mxu0 0.0
  %290 = vmatpush1.msra.mxu0 0.0
  %291 = vmatprep.subr.mxu0 0.0
  %292 = vmatpush1.msra.mxu0 0.0
  %293 = vmatprep.subr.mxu0 0.0
  %294 = vmatpush1.msra.mxu0 0.0
  %295 = vmatprep.subr.mxu0 0.0
  %296 = vmatpush1.msra.mxu0 0.0
  %297 = vmatprep.subr.mxu0 0.0
  %298 = vmatpush1.msra.mxu0 0.0
  %299 = vmatprep.subr.mxu0 0.0
  %300 = vmatpush1.msra.mxu0 0.0
  %301 = vmatprep.subr.mxu0 0.0
  %302 = vmatpush1.msra.mxu0 0.0
  %303 = vmatprep.subr.mxu0 0.0
  %304 = vmatpush1.msra.mxu0 0.0
  %305 = vmatprep.subr.mxu0 0.0
  %306 = vmatpush1.msra.mxu0 0.0
  %307 = vmatprep.subr.mxu0 0.0
  %308 = vmatpush1.msra.mxu0 0.0
  %309 = vmatprep.subr.mxu0 0.0
  %310 = vmatpush1.msra.mxu0 0.0
  %311 = vmatprep.subr.mxu0 0.0
  %312 = vmatpush1.msra.mxu0 0.0
  %313 = vmatprep.subr.mxu0 0.0
  %314 = vmatpush1.msra.mxu0 0.0
  %315 = vmatprep.subr.mxu0 0.0
  %316 = vmatpush1.msra.mxu0 0.0
  %317 = vmatprep.subr.mxu0 0.0
  %318 = vmatpush1.msra.mxu0 0.0
  %319 = vmatprep.subr.mxu0 0.0
  %320 = vmatpush1.msra.mxu0 0.0
  %321 = vmatprep.subr.mxu0 0.0
  %322 = vmatpush1.msra.mxu0 0.0
  %323 = vmatprep.subr.mxu0 0.0
  %324 = vmatpush1.msra.mxu0 0.0
  %325 = vmatprep.subr.mxu0 0.0
  %326 = vmatpush1.msra.mxu0 0.0
  %327 = vmatprep.subr.mxu0 0.0
  %328 = vmatpush1.msra.mxu0 0.0
  %329 = vmatprep.subr.mxu0 0.0
  %330 = vmatpush1.msra.mxu0 0.0
  %331 = vmatprep.subr.mxu0 0.0
  %332 = vmatpush1.msra.mxu0 0.0
  %333 = vmatprep.subr.mxu0 0.0
  %334 = vmatpush1.msra.mxu0 0.0
  %335 = vmatprep.subr.mxu0 0.0
  %336 = vmatpush1.msra.mxu0 0.0
  %337 = vmatprep.subr.mxu0 0.0
  %338 = vmatpush1.msra.mxu0 0.0
  %339 = vmatprep.mubr.f32.mxu0 0.0
  %340 = vmatmul.mubr.f32.gmra.mrb[0].mxu0 %v29
  %v341 = vpop.f32.mrb[0].mxu0
  %v342 = vadd.f32 0.0, %v341
  %v343 = vpop.f32.mrb[0].mxu0
  %344 = vdwg.mxu0
  %v345 = vmax.f32 %v108, %v271
  %v346 = vmax.f32 %v110, %v273
  %v347 = vmax.f32 %v179, %v342
  %s348 = scalar_lea.vmem %s0, 192
  %v349 = vld [vmem:[%s348] sm:$0xff]
  %v350 = vld [vmem:[%s348 + $0x8] sm:$0xff]
  %v351 = vld [vmem:[%s348 + $0x10] sm:$0xff]
  %v352 = vld [vmem:[%s348 + $0x18] sm:$0xff]
  %v353 = vld [vmem:[%s348 + $0x20] sm:$0xff]
  %v354 = vld [vmem:[%s348 + $0x28] sm:$0xff]
  %v355 = vld [vmem:[%s348 + $0x30] sm:$0xff]
  %v356 = vld [vmem:[%s348 + $0x38] sm:$0xff]
  %v357 = vld [vmem:[%s348 + $0x40] sm:$0xff]
  %v358 = vld [vmem:[%s348 + $0x48] sm:$0x1]
  %v359 = vld [vmem:[%s348 + $0x50] sm:$0x1]
  %v360 = vld [vmem:[%s348 + $0x58] sm:$0x1]
  %v362 = vsel %vm31, %v358, 0
  %v365 = vsel %vm31, %v359, 0
  %v368 = vsel %vm31, %v360, 0
  %370 = vmatprep.subr.mxu0 %v350
  %371 = vmatpush1.msra.mxu0 %v349
  %372 = vmatprep.subr.mxu0 %v353
  %373 = vmatpush1.msra.mxu0 %v352
  %374 = vmatprep.subr.mxu0 %v356
  %375 = vmatpush1.msra.mxu0 %v355
  %376 = vmatprep.subr.mxu0 %v365
  %377 = vmatpush1.msra.mxu0 %v362
  %378 = vmatprep.subr.mxu0 0.0
  %379 = vmatpush1.msra.mxu0 0.0
  %380 = vmatprep.subr.mxu0 0.0
  %381 = vmatpush1.msra.mxu0 0.0
  %382 = vmatprep.subr.mxu0 0.0
  %383 = vmatpush1.msra.mxu0 0.0
  %384 = vmatprep.subr.mxu0 0.0
  %385 = vmatpush1.msra.mxu0 0.0
  %386 = vmatprep.subr.mxu0 0.0
  %387 = vmatpush1.msra.mxu0 0.0
  %388 = vmatprep.subr.mxu0 0.0
  %389 = vmatpush1.msra.mxu0 0.0
  %390 = vmatprep.subr.mxu0 0.0
  %391 = vmatpush1.msra.mxu0 0.0
  %392 = vmatprep.subr.mxu0 0.0
  %393 = vmatpush1.msra.mxu0 0.0
  %394 = vmatprep.subr.mxu0 0.0
  %395 = vmatpush1.msra.mxu0 0.0
  %396 = vmatprep.subr.mxu0 0.0
  %397 = vmatpush1.msra.mxu0 0.0
  %398 = vmatprep.subr.mxu0 0.0
  %399 = vmatpush1.msra.mxu0 0.0
  %400 = vmatprep.subr.mxu0 0.0
  %401 = vmatpush1.msra.mxu0 0.0
  %402 = vmatprep.subr.mxu0 0.0
  %403 = vmatpush1.msra.mxu0 0.0
  %404 = vmatprep.subr.mxu0 0.0
  %405 = vmatpush1.msra.mxu0 0.0
  %406 = vmatprep.subr.mxu0 0.0
  %407 = vmatpush1.msra.mxu0 0.0
  %408 = vmatprep.subr.mxu0 0.0
  %409 = vmatpush1.msra.mxu0 0.0
  %410 = vmatprep.subr.mxu0 0.0
  %411 = vmatpush1.msra.mxu0 0.0
  %412 = vmatprep.subr.mxu0 0.0
  %413 = vmatpush1.msra.mxu0 0.0
  %414 = vmatprep.subr.mxu0 0.0
  %415 = vmatpush1.msra.mxu0 0.0
  %416 = vmatprep.subr.mxu0 0.0
  %417 = vmatpush1.msra.mxu0 0.0
  %418 = vmatprep.subr.mxu0 0.0
  %419 = vmatpush1.msra.mxu0 0.0
  %420 = vmatprep.subr.mxu0 0.0
  %421 = vmatpush1.msra.mxu0 0.0
  %422 = vmatprep.subr.mxu0 0.0
  %423 = vmatpush1.msra.mxu0 0.0
  %424 = vmatprep.subr.mxu0 0.0
  %425 = vmatpush1.msra.mxu0 0.0
  %426 = vmatprep.subr.mxu0 0.0
  %427 = vmatpush1.msra.mxu0 0.0
  %428 = vmatprep.subr.mxu0 0.0
  %429 = vmatpush1.msra.mxu0 0.0
  %430 = vmatprep.subr.mxu0 0.0
  %431 = vmatpush1.msra.mxu0 0.0
  %432 = vmatprep.subr.mxu0 0.0
  %433 = vmatpush1.msra.mxu0 0.0
  %434 = vmatprep.mubr.f32.mxu0 0.0
  %435 = vmatmul.mubr.f32.gmra.mrb[0].mxu0 %v29
  %v436 = vpop.f32.mrb[0].mxu0
  %v437 = vadd.f32 0.0, %v436
  %v438 = vpop.f32.mrb[0].mxu0
  %v439 = vadd.f32 0.0, %v438
  %440 = vdwg.mxu0
  %441 = vmatprep.subr.mxu0 0.0
  %442 = vmatpush1.msra.mxu0 %v351
  %443 = vmatprep.subr.mxu0 0.0
  %444 = vmatpush1.msra.mxu0 %v354
  %445 = vmatprep.subr.mxu0 0.0
  %446 = vmatpush1.msra.mxu0 %v357
  %447 = vmatprep.subr.mxu0 0.0
  %448 = vmatpush1.msra.mxu0 %v368
  %449 = vmatprep.subr.mxu0 0.0
  %450 = vmatpush1.msra.mxu0 0.0
  %451 = vmatprep.subr.mxu0 0.0
  %452 = vmatpush1.msra.mxu0 0.0
  %453 = vmatprep.subr.mxu0 0.0
  %454 = vmatpush1.msra.mxu0 0.0
  %455 = vmatprep.subr.mxu0 0.0
  %456 = vmatpush1.msra.mxu0 0.0
  %457 = vmatprep.subr.mxu0 0.0
  %458 = vmatpush1.msra.mxu0 0.0
  %459 = vmatprep.subr.mxu0 0.0
  %460 = vmatpush1.msra.mxu0 0.0
  %461 = vmatprep.subr.mxu0 0.0
  %462 = vmatpush1.msra.mxu0 0.0
  %463 = vmatprep.subr.mxu0 0.0
  %464 = vmatpush1.msra.mxu0 0.0
  %465 = vmatprep.subr.mxu0 0.0
  %466 = vmatpush1.msra.mxu0 0.0
  %467 = vmatprep.subr.mxu0 0.0
  %468 = vmatpush1.msra.mxu0 0.0
  %469 = vmatprep.subr.mxu0 0.0
  %470 = vmatpush1.msra.mxu0 0.0
  %471 = vmatprep.subr.mxu0 0.0
  %472 = vmatpush1.msra.mxu0 0.0
  %473 = vmatprep.subr.mxu0 0.0
  %474 = vmatpush1.msra.mxu0 0.0
  %475 = vmatprep.subr.mxu0 0.0
  %476 = vmatpush1.msra.mxu0 0.0
  %477 = vmatprep.subr.mxu0 0.0
  %478 = vmatpush1.msra.mxu0 0.0
  %479 = vmatprep.subr.mxu0 0.0
  %480 = vmatpush1.msra.mxu0 0.0
  %481 = vmatprep.subr.mxu0 0.0
  %482 = vmatpush1.msra.mxu0 0.0
  %483 = vmatprep.subr.mxu0 0.0
  %484 = vmatpush1.msra.mxu0 0.0
  %485 = vmatprep.subr.mxu0 0.0
  %486 = vmatpush1.msra.mxu0 0.0
  %487 = vmatprep.subr.mxu0 0.0
  %488 = vmatpush1.msra.mxu0 0.0
  %489 = vmatprep.subr.mxu0 0.0
  %490 = vmatpush1.msra.mxu0 0.0
  %491 = vmatprep.subr.mxu0 0.0
  %492 = vmatpush1.msra.mxu0 0.0
  %493 = vmatprep.subr.mxu0 0.0
  %494 = vmatpush1.msra.mxu0 0.0
  %495 = vmatprep.subr.mxu0 0.0
  %496 = vmatpush1.msra.mxu0 0.0
  %497 = vmatprep.subr.mxu0 0.0
  %498 = vmatpush1.msra.mxu0 0.0
  %499 = vmatprep.subr.mxu0 0.0
  %500 = vmatpush1.msra.mxu0 0.0
  %501 = vmatprep.subr.mxu0 0.0
  %502 = vmatpush1.msra.mxu0 0.0
  %503 = vmatprep.subr.mxu0 0.0
  %504 = vmatpush1.msra.mxu0 0.0
  %505 = vmatprep.mubr.f32.mxu0 0.0
  %506 = vmatmul.mubr.f32.gmra.mrb[0].mxu0 %v29
  %v507 = vpop.f32.mrb[0].mxu0
  %v508 = vadd.f32 0.0, %v507
  %v509 = vpop.f32.mrb[0].mxu0
  %510 = vdwg.mxu0
  %v511 = vmax.f32 %v345, %v437
  %v512 = vmax.f32 %v346, %v439
  %v513 = vmax.f32 %v347, %v508
  %s514 = scalar_lea.vmem %s0, 288
  %v515 = vld [vmem:[%s514] sm:$0xff]
  %v516 = vld [vmem:[%s514 + $0x8] sm:$0xff]
  %v517 = vld [vmem:[%s514 + $0x10] sm:$0xff]
  %v518 = vld [vmem:[%s514 + $0x18] sm:$0xff]
  %v519 = vld [vmem:[%s514 + $0x20] sm:$0xff]
  %v520 = vld [vmem:[%s514 + $0x28] sm:$0xff]
  %v521 = vld [vmem:[%s514 + $0x30] sm:$0xff]
  %v522 = vld [vmem:[%s514 + $0x38] sm:$0xff]
  %v523 = vld [vmem:[%s514 + $0x40] sm:$0xff]
  %v524 = vld [vmem:[%s514 + $0x48] sm:$0x1]
  %v525 = vld [vmem:[%s514 + $0x50] sm:$0x1]
  %v526 = vld [vmem:[%s514 + $0x58] sm:$0x1]
  %v528 = vsel %vm31, %v524, 0
  %v531 = vsel %vm31, %v525, 0
  %v534 = vsel %vm31, %v526, 0
  %536 = vmatprep.subr.mxu0 %v516
  %537 = vmatpush1.msra.mxu0 %v515
  %538 = vmatprep.subr.mxu0 %v519
  %539 = vmatpush1.msra.mxu0 %v518
  %540 = vmatprep.subr.mxu0 %v522
  %541 = vmatpush1.msra.mxu0 %v521
  %542 = vmatprep.subr.mxu0 %v531
  %543 = vmatpush1.msra.mxu0 %v528
  %544 = vmatprep.subr.mxu0 0.0
  %545 = vmatpush1.msra.mxu0 0.0
  %546 = vmatprep.subr.mxu0 0.0
  %547 = vmatpush1.msra.mxu0 0.0
  %548 = vmatprep.subr.mxu0 0.0
  %549 = vmatpush1.msra.mxu0 0.0
  %550 = vmatprep.subr.mxu0 0.0
  %551 = vmatpush1.msra.mxu0 0.0
  %552 = vmatprep.subr.mxu0 0.0
  %553 = vmatpush1.msra.mxu0 0.0
  %554 = vmatprep.subr.mxu0 0.0
  %555 = vmatpush1.msra.mxu0 0.0
  %556 = vmatprep.subr.mxu0 0.0
  %557 = vmatpush1.msra.mxu0 0.0
  %558 = vmatprep.subr.mxu0 0.0
  %559 = vmatpush1.msra.mxu0 0.0
  %560 = vmatprep.subr.mxu0 0.0
  %561 = vmatpush1.msra.mxu0 0.0
  %562 = vmatprep.subr.mxu0 0.0
  %563 = vmatpush1.msra.mxu0 0.0
  %564 = vmatprep.subr.mxu0 0.0
  %565 = vmatpush1.msra.mxu0 0.0
  %566 = vmatprep.subr.mxu0 0.0
  %567 = vmatpush1.msra.mxu0 0.0
  %568 = vmatprep.subr.mxu0 0.0
  %569 = vmatpush1.msra.mxu0 0.0
  %570 = vmatprep.subr.mxu0 0.0
  %571 = vmatpush1.msra.mxu0 0.0
  %572 = vmatprep.subr.mxu0 0.0
  %573 = vmatpush1.msra.mxu0 0.0
  %574 = vmatprep.subr.mxu0 0.0
  %575 = vmatpush1.msra.mxu0 0.0
  %576 = vmatprep.subr.mxu0 0.0
  %577 = vmatpush1.msra.mxu0 0.0
  %578 = vmatprep.subr.mxu0 0.0
  %579 = vmatpush1.msra.mxu0 0.0
  %580 = vmatprep.subr.mxu0 0.0
  %581 = vmatpush1.msra.mxu0 0.0
  %582 = vmatprep.subr.mxu0 0.0
  %583 = vmatpush1.msra.mxu0 0.0
  %584 = vmatprep.subr.mxu0 0.0
  %585 = vmatpush1.msra.mxu0 0.0
  %586 = vmatprep.subr.mxu0 0.0
  %587 = vmatpush1.msra.mxu0 0.0
  %588 = vmatprep.subr.mxu0 0.0
  %589 = vmatpush1.msra.mxu0 0.0
  %590 = vmatprep.subr.mxu0 0.0
  %591 = vmatpush1.msra.mxu0 0.0
  %592 = vmatprep.subr.mxu0 0.0
  %593 = vmatpush1.msra.mxu0 0.0
  %594 = vmatprep.subr.mxu0 0.0
  %595 = vmatpush1.msra.mxu0 0.0
  %596 = vmatprep.subr.mxu0 0.0
  %597 = vmatpush1.msra.mxu0 0.0
  %598 = vmatprep.subr.mxu0 0.0
  %599 = vmatpush1.msra.mxu0 0.0
  %600 = vmatprep.mubr.f32.mxu0 0.0
  %601 = vmatmul.mubr.f32.gmra.mrb[0].mxu0 %v29
  %v602 = vpop.f32.mrb[0].mxu0
  %v603 = vadd.f32 0.0, %v602
  %v604 = vpop.f32.mrb[0].mxu0
  %v605 = vadd.f32 0.0, %v604
  %606 = vdwg.mxu0
  %607 = vmatprep.subr.mxu0 0.0
  %608 = vmatpush1.msra.mxu0 %v517
  %609 = vmatprep.subr.mxu0 0.0
  %610 = vmatpush1.msra.mxu0 %v520
  %611 = vmatprep.subr.mxu0 0.0
  %612 = vmatpush1.msra.mxu0 %v523
  %613 = vmatprep.subr.mxu0 0.0
  %614 = vmatpush1.msra.mxu0 %v534
  %615 = vmatprep.subr.mxu0 0.0
  %616 = vmatpush1.msra.mxu0 0.0
  %617 = vmatprep.subr.mxu0 0.0
  %618 = vmatpush1.msra.mxu0 0.0
  %619 = vmatprep.subr.mxu0 0.0
  %620 = vmatpush1.msra.mxu0 0.0
  %621 = vmatprep.subr.mxu0 0.0
  %622 = vmatpush1.msra.mxu0 0.0
  %623 = vmatprep.subr.mxu0 0.0
  %624 = vmatpush1.msra.mxu0 0.0
  %625 = vmatprep.subr.mxu0 0.0
  %626 = vmatpush1.msra.mxu0 0.0
  %627 = vmatprep.subr.mxu0 0.0
  %628 = vmatpush1.msra.mxu0 0.0
  %629 = vmatprep.subr.mxu0 0.0
  %630 = vmatpush1.msra.mxu0 0.0
  %631 = vmatprep.subr.mxu0 0.0
  %632 = vmatpush1.msra.mxu0 0.0
  %633 = vmatprep.subr.mxu0 0.0
  %634 = vmatpush1.msra.mxu0 0.0
  %635 = vmatprep.subr.mxu0 0.0
  %636 = vmatpush1.msra.mxu0 0.0
  %637 = vmatprep.subr.mxu0 0.0
  %638 = vmatpush1.msra.mxu0 0.0
  %639 = vmatprep.subr.mxu0 0.0
  %640 = vmatpush1.msra.mxu0 0.0
  %641 = vmatprep.subr.mxu0 0.0
  %642 = vmatpush1.msra.mxu0 0.0
  %643 = vmatprep.subr.mxu0 0.0
  %644 = vmatpush1.msra.mxu0 0.0
  %645 = vmatprep.subr.mxu0 0.0
  %646 = vmatpush1.msra.mxu0 0.0
  %647 = vmatprep.subr.mxu0 0.0
  %648 = vmatpush1.msra.mxu0 0.0
  %649 = vmatprep.subr.mxu0 0.0
  %650 = vmatpush1.msra.mxu0 0.0
  %651 = vmatprep.subr.mxu0 0.0
  %652 = vmatpush1.msra.mxu0 0.0
  %653 = vmatprep.subr.mxu0 0.0
  %654 = vmatpush1.msra.mxu0 0.0
  %655 = vmatprep.subr.mxu0 0.0
  %656 = vmatpush1.msra.mxu0 0.0
  %657 = vmatprep.subr.mxu0 0.0
  %658 = vmatpush1.msra.mxu0 0.0
  %659 = vmatprep.subr.mxu0 0.0
  %660 = vmatpush1.msra.mxu0 0.0
  %661 = vmatprep.subr.mxu0 0.0
  %662 = vmatpush1.msra.mxu0 0.0
  %663 = vmatprep.subr.mxu0 0.0
  %664 = vmatpush1.msra.mxu0 0.0
  %665 = vmatprep.subr.mxu0 0.0
  %666 = vmatpush1.msra.mxu0 0.0
  %667 = vmatprep.subr.mxu0 0.0
  %668 = vmatpush1.msra.mxu0 0.0
  %669 = vmatprep.subr.mxu0 0.0
  %670 = vmatpush1.msra.mxu0 0.0
  %671 = vmatprep.mubr.f32.mxu0 0.0
  %672 = vmatmul.mubr.f32.gmra.mrb[0].mxu0 %v29
  %v673 = vpop.f32.mrb[0].mxu0
  %v674 = vadd.f32 0.0, %v673
  %v675 = vpop.f32.mrb[0].mxu0
  %676 = vdwg.mxu0
  %v677 = vmax.f32 %v511, %v603
  %v678 = vmax.f32 %v512, %v605
  %v679 = vmax.f32 %v513, %v674
  %v680 = vld [vmem:[%s2] sm:$0x3f]
  %682 = vset.pattern.permute.xlu0 0
  %683 = vperm.xlu0 %682, %v680
  %v684 = vpop.permute.xlu0 %683
  %v686 = vadd.f32 %v677, %v684
  %v687 = vadd.f32 %v678, %v684
  %v688 = vadd.f32 %v679, %v684
  %v689 = vmax.f32 %v686, 0.0
  %v690 = vmax.f32 %v687, 0.0
  %v691 = vmax.f32 %v688, 0.0
  %692 = vst [vmem:[%s3] sm:$0x3f] %v689
  %693 = vst [vmem:[%s3 + $0x8] sm:$0x3f] %v690
  %vm694 = vcmask 259072
  %695 = vst.msk [vmem:[%s3 + $0x10] sm:$0x3f] %vm694, %v691
  // Predicated region
  $region14: #{lenet5_forward.3} parent=0 // pred_check
    _
  $region15: #{lenet5_forward.3} parent=0 // pred_check_branch
    %697 = sbr.rel (0) target = $region17
  $region16: #{lenet5_forward.3} parent=0 // pred_region
    _
  $region17: #{lenet5_forward.3} parent=0 // pred_fallthru
    _
  // Predicated region
  $region18: #{lenet5_forward.3} parent=0 // pred_check
    _
  $region19: #{lenet5_forward.3} parent=0 // pred_check_branch
    %699 = sbr.rel (0) target = $region21
  $region20: #{lenet5_forward.3} parent=0 // pred_region
    _
  $region21: #{lenet5_forward.3} parent=0 // pred_fallthru
    _

// kernel: lenet5_forward.4
$region0: #{lenet5_forward.4}
  #allocation0 [shape = 'u32[]', space=smem, size = 0x4, offset = 0x4, fixed_abs, tag = 'smem constant byte address 0x4 - core index']
  #allocation1 [shape = 'u32[144,128]{1,0:T(1,128)}', space=vmem, size = 0x12000, scoped, tag = 'internal scratch']
  %s0 = inlined_call_operand.vmem [shape: f32[4,150,32], index: 0, kind: input, shape index: {}]
  %s1 = inlined_call_operand.vmem [shape: f32[16,150], index: 1, kind: input, shape index: {}]
  %s2 = inlined_call_operand.vmem [shape: f32[16,1], index: 2, kind: input, shape index: {}]
  %s3 = inlined_call_operand.vmem [shape: f32[16,32], index: 3, kind: output, shape index: {}]
  %s4 = sld [smem:[#allocation0]]
  $region22: #{lenet5_forward.4} parent=0
    _
  %s6 = ssub.s32 1, %s4
  %s7 = scalar_select 0, %s6, %s4
  // Predicated region
  $region2: #{lenet5_forward.4} parent=0 // pred_check
    _
  $region3: #{lenet5_forward.4} parent=0 // pred_check_branch
    %9 = sbr.rel (0) target = $region5
  $region4: #{lenet5_forward.4} parent=0 // pred_region
    _
  $region5: #{lenet5_forward.4} parent=0 // pred_fallthru
    _
  // Predicated region
  $region6: #{lenet5_forward.4} parent=0 // pred_check
    _
  $region7: #{lenet5_forward.4} parent=0 // pred_check_branch
    %11 = sbr.rel (0) target = $region9
  $region8: #{lenet5_forward.4} parent=0 // pred_region
    _
  $region9: #{lenet5_forward.4} parent=0 // pred_fallthru
    _
  // Predicated region
  $region10: #{lenet5_forward.4} parent=0 // pred_check
    _
  $region11: #{lenet5_forward.4} parent=0 // pred_check_branch
    %13 = sbr.rel (0) target = $region13
  $region12: #{lenet5_forward.4} parent=0 // pred_region
    _
  $region13: #{lenet5_forward.4} parent=0 // pred_fallthru
    _
  %v14 = vld [vmem:[%s1] sm:$0xff]
  %v15 = vld [vmem:[%s1 + $0x8] sm:$0xff]
  %v16 = vld [vmem:[%s1 + $0x10] sm:$0xff]
  %v17 = vld [vmem:[%s1 + $0x18] sm:$0xff]
  %v18 = vld [vmem:[%s0] sm:$0xff]
  %v19 = vld [vmem:[%s0 + $0x8] sm:$0xff]
  %v20 = vld [vmem:[%s0 + $0x10] sm:$0xff]
  %v21 = vld [vmem:[%s0 + $0x18] sm:$0xff]
  %v22 = vld [vmem:[%s0 + $0x20] sm:$0xff]
  %v23 = vld [vmem:[%s0 + $0x28] sm:$0xff]
  %v24 = vld [vmem:[%s0 + $0x30] sm:$0xff]
  %v25 = vld [vmem:[%s0 + $0x38] sm:$0xff]
  %v26 = vld [vmem:[%s0 + $0x40] sm:$0xff]
  %v27 = vld [vmem:[%s0 + $0x48] sm:$0xff]
  %v28 = vld [vmem:[%s0 + $0x50] sm:$0xff]
  %v29 = vld [vmem:[%s0 + $0x58] sm:$0xff]
  %v30 = vld [vmem:[%s0 + $0x60] sm:$0xff]
  %v31 = vld [vmem:[%s0 + $0x68] sm:$0xff]
  %v32 = vld [vmem:[%s0 + $0x70] sm:$0xff]
  %v33 = vld [vmem:[%s0 + $0x78] sm:$0xff]
  %v34 = vld [vmem:[%s0 + $0x80] sm:$0xff]
  %v35 = vld [vmem:[%s0 + $0x88] sm:$0xff]
  %v36 = vld [vmem:[%s0 + $0x90] sm:$0x3f]
  %vm37 = vcmask 179200
  %v39 = vsel %vm37, %v15, 0
  %v42 = vsel %vm37, %v17, 0
  %vm44 = vcmask 1045504
  %v46 = vsel %vm44, %v36, 0
  %48 = vmatprep.subr.mxu0 0.0
  %49 = vmatpush1.msra.mxu0 %v18
  %50 = vmatprep.subr.mxu0 0.0
  %51 = vmatpush1.msra.mxu0 %v19
  %52 = vmatprep.subr.mxu0 0.0
  %53 = vmatpush1.msra.mxu0 %v20
  %54 = vmatprep.subr.mxu0 0.0
  %55 = vmatpush1.msra.mxu0 %v21
  %56 = vmatprep.subr.mxu0 0.0
  %57 = vmatpush1.msra.mxu0 %v22
  %58 = vmatprep.subr.mxu0 0.0
  %59 = vmatpush1.msra.mxu0 %v23
  %60 = vmatprep.subr.mxu0 0.0
  %61 = vmatpush1.msra.mxu0 %v24
  %62 = vmatprep.subr.mxu0 0.0
  %63 = vmatpush1.msra.mxu0 %v25
  %64 = vmatprep.subr.mxu0 0.0
  %65 = vmatpush1.msra.mxu0 %v26
  %66 = vmatprep.subr.mxu0 0.0
  %67 = vmatpush1.msra.mxu0 %v27
  %68 = vmatprep.subr.mxu0 0.0
  %69 = vmatpush1.msra.mxu0 %v28
  %70 = vmatprep.subr.mxu0 0.0
  %71 = vmatpush1.msra.mxu0 %v29
  %72 = vmatprep.subr.mxu0 0.0
  %73 = vmatpush1.msra.mxu0 %v30
  %74 = vmatprep.subr.mxu0 0.0
  %75 = vmatpush1.msra.mxu0 %v31
  %76 = vmatprep.subr.mxu0 0.0
  %77 = vmatpush1.msra.mxu0 %v32
  %78 = vmatprep.subr.mxu0 0.0
  %79 = vmatpush1.msra.mxu0 %v33
  %80 = vmatprep.subr.mxu0 0.0
  %81 = vmatpush1.msra.mxu0 %v34
  %82 = vmatprep.subr.mxu0 0.0
  %83 = vmatpush1.msra.mxu0 %v35
  %84 = vmatprep.subr.mxu0 0.0
  %85 = vmatpush1.msra.mxu0 %v46
  %86 = vmatprep.subr.mxu0 0.0
  %87 = vmatpush1.msra.mxu0 0.0
  %88 = vmatprep.subr.mxu0 0.0
  %89 = vmatpush1.msra.mxu0 0.0
  %90 = vmatprep.subr.mxu0 0.0
  %91 = vmatpush1.msra.mxu0 0.0
  %92 = vmatprep.subr.mxu0 0.0
  %93 = vmatpush1.msra.mxu0 0.0
  %94 = vmatprep.subr.mxu0 0.0
  %95 = vmatpush1.msra.mxu0 0.0
  %96 = vmatprep.subr.mxu0 0.0
  %97 = vmatpush1.msra.mxu0 0.0
  %98 = vmatprep.subr.mxu0 0.0
  %99 = vmatpush1.msra.mxu0 0.0
  %100 = vmatprep.subr.mxu0 0.0
  %101 = vmatpush1.msra.mxu0 0.0
  %102 = vmatprep.subr.mxu0 0.0
  %103 = vmatpush1.msra.mxu0 0.0
  %104 = vmatprep.subr.mxu0 0.0
  %105 = vmatpush1.msra.mxu0 0.0
  %106 = vmatprep.subr.mxu0 0.0
  %107 = vmatpush1.msra.mxu0 0.0
  %108 = vmatprep.subr.mxu0 0.0
  %109 = vmatpush1.msra.mxu0 0.0
  %110 = vmatprep.subr.mxu0 0.0
  %111 = vmatpush1.msra.mxu0 0.0
  %112 = vmatprep.mubr.f32.mxu0 %v39
  %113 = vmatmul.mubr.f32.gmra.mrb[0].mxu0 %v14
  %v114 = vpop.f32.mrb[0].mxu0
  %v115 = vadd.f32 0.0, %v114
  %v116 = vpop.f32.mrb[0].mxu0
  %117 = vmatprep.mubr.f32.mxu0 %v42
  %118 = vmatmul.mubr.f32.gmra.mrb[0].mxu0 %v16
  %v119 = vpop.f32.mrb[0].mxu0
  %v120 = vadd.f32 0.0, %v119
  %v121 = vpop.f32.mrb[0].mxu0
  %122 = vdwg.mxu0
  %s123 = scalar_lea.vmem %s0, 152
  %v124 = vld [vmem:[%s123] sm:$0xff]
  %v125 = vld [vmem:[%s123 + $0x8] sm:$0xff]
  %v126 = vld [vmem:[%s123 + $0x10] sm:$0xff]
  %v127 = vld [vmem:[%s123 + $0x18] sm:$0xff]
  %v128 = vld [vmem:[%s123 + $0x20] sm:$0xff]
  %v129 = vld [vmem:[%s123 + $0x28] sm:$0xff]
  %v130 = vld [vmem:[%s123 + $0x30] sm:$0xff]
  %v131 = vld [vmem:[%s123 + $0x38] sm:$0xff]
  %v132 = vld [vmem:[%s123 + $0x40] sm:$0xff]
  %v133 = vld [vmem:[%s123 + $0x48] sm:$0xff]
  %v134 = vld [vmem:[%s123 + $0x50] sm:$0xff]
  %v135 = vld [vmem:[%s123 + $0x58] sm:$0xff]
  %v136 = vld [vmem:[%s123 + $0x60] sm:$0xff]
  %v137 = vld [vmem:[%s123 + $0x68] sm:$0xff]
  %v138 = vld [vmem:[%s123 + $0x70] sm:$0xff]
  %v139 = vld [vmem:[%s123 + $0x78] sm:$0xff]
  %v140 = vld [vmem:[%s123 + $0x80] sm:$0xff]
  %v141 = vld [vmem:[%s123 + $0x88] sm:$0xff]
  %v142 = vld [vmem:[%s123 + $0x90] sm:$0x3f]
  %v144 = vsel %vm44, %v142, 0
  %146 = vmatprep.subr.mxu0 0.0
  %147 = vmatpush1.msra.mxu0 %v124
  %148 = vmatprep.subr.mxu0 0.0
  %149 = vmatpush1.msra.mxu0 %v125
  %150 = vmatprep.subr.mxu0 0.0
  %151 = vmatpush1.msra.mxu0 %v126
  %152 = vmatprep.subr.mxu0 0.0
  %153 = vmatpush1.msra.mxu0 %v127
  %154 = vmatprep.subr.mxu0 0.0
  %155 = vmatpush1.msra.mxu0 %v128
  %156 = vmatprep.subr.mxu0 0.0
  %157 = vmatpush1.msra.mxu0 %v129
  %158 = vmatprep.subr.mxu0 0.0
  %159 = vmatpush1.msra.mxu0 %v130
  %160 = vmatprep.subr.mxu0 0.0
  %161 = vmatpush1.msra.mxu0 %v131
  %162 = vmatprep.subr.mxu0 0.0
  %163 = vmatpush1.msra.mxu0 %v132
  %164 = vmatprep.subr.mxu0 0.0
  %165 = vmatpush1.msra.mxu0 %v133
  %166 = vmatprep.subr.mxu0 0.0
  %167 = vmatpush1.msra.mxu0 %v134
  %168 = vmatprep.subr.mxu0 0.0
  %169 = vmatpush1.msra.mxu0 %v135
  %170 = vmatprep.subr.mxu0 0.0
  %171 = vmatpush1.msra.mxu0 %v136
  %172 = vmatprep.subr.mxu0 0.0
  %173 = vmatpush1.msra.mxu0 %v137
  %174 = vmatprep.subr.mxu0 0.0
  %175 = vmatpush1.msra.mxu0 %v138
  %176 = vmatprep.subr.mxu0 0.0
  %177 = vmatpush1.msra.mxu0 %v139
  %178 = vmatprep.subr.mxu0 0.0
  %179 = vmatpush1.msra.mxu0 %v140
  %180 = vmatprep.subr.mxu0 0.0
  %181 = vmatpush1.msra.mxu0 %v141
  %182 = vmatprep.subr.mxu0 0.0
  %183 = vmatpush1.msra.mxu0 %v144
  %184 = vmatprep.subr.mxu0 0.0
  %185 = vmatpush1.msra.mxu0 0.0
  %186 = vmatprep.subr.mxu0 0.0
  %187 = vmatpush1.msra.mxu0 0.0
  %188 = vmatprep.subr.mxu0 0.0
  %189 = vmatpush1.msra.mxu0 0.0
  %190 = vmatprep.subr.mxu0 0.0
  %191 = vmatpush1.msra.mxu0 0.0
  %192 = vmatprep.subr.mxu0 0.0
  %193 = vmatpush1.msra.mxu0 0.0
  %194 = vmatprep.subr.mxu0 0.0
  %195 = vmatpush1.msra.mxu0 0.0
  %196 = vmatprep.subr.mxu0 0.0
  %197 = vmatpush1.msra.mxu0 0.0
  %198 = vmatprep.subr.mxu0 0.0
  %199 = vmatpush1.msra.mxu0 0.0
  %200 = vmatprep.subr.mxu0 0.0
  %201 = vmatpush1.msra.mxu0 0.0
  %202 = vmatprep.subr.mxu0 0.0
  %203 = vmatpush1.msra.mxu0 0.0
  %204 = vmatprep.subr.mxu0 0.0
  %205 = vmatpush1.msra.mxu0 0.0
  %206 = vmatprep.subr.mxu0 0.0
  %207 = vmatpush1.msra.mxu0 0.0
  %208 = vmatprep.subr.mxu0 0.0
  %209 = vmatpush1.msra.mxu0 0.0
  %210 = vmatprep.mubr.f32.mxu0 %v39
  %211 = vmatmul.mubr.f32.gmra.mrb[0].mxu0 %v14
  %v212 = vpop.f32.mrb[0].mxu0
  %v213 = vadd.f32 0.0, %v212
  %v214 = vpop.f32.mrb[0].mxu0
  %215 = vmatprep.mubr.f32.mxu0 %v42
  %216 = vmatmul.mubr.f32.gmra.mrb[0].mxu0 %v16
  %v217 = vpop.f32.mrb[0].mxu0
  %v218 = vadd.f32 0.0, %v217
  %v219 = vpop.f32.mrb[0].mxu0
  %220 = vdwg.mxu0
  %v221 = vmax.f32 %v115, %v213
  %v222 = vmax.f32 %v120, %v218
  %s223 = scalar_lea.vmem %s0, 304
  %v224 = vld [vmem:[%s223] sm:$0xff]
  %v225 = vld [vmem:[%s223 + $0x8] sm:$0xff]
  %v226 = vld [vmem:[%s223 + $0x10] sm:$0xff]
  %v227 = vld [vmem:[%s223 + $0x18] sm:$0xff]
  %v228 = vld [vmem:[%s223 + $0x20] sm:$0xff]
  %v229 = vld [vmem:[%s223 + $0x28] sm:$0xff]
  %v230 = vld [vmem:[%s223 + $0x30] sm:$0xff]
  %v231 = vld [vmem:[%s223 + $0x38] sm:$0xff]
  %v232 = vld [vmem:[%s223 + $0x40] sm:$0xff]
  %v233 = vld [vmem:[%s223 + $0x48] sm:$0xff]
  %v234 = vld [vmem:[%s223 + $0x50] sm:$0xff]
  %v235 = vld [vmem:[%s223 + $0x58] sm:$0xff]
  %v236 = vld [vmem:[%s223 + $0x60] sm:$0xff]
  %v237 = vld [vmem:[%s223 + $0x68] sm:$0xff]
  %v238 = vld [vmem:[%s223 + $0x70] sm:$0xff]
  %v239 = vld [vmem:[%s223 + $0x78] sm:$0xff]
  %v240 = vld [vmem:[%s223 + $0x80] sm:$0xff]
  %v241 = vld [vmem:[%s223 + $0x88] sm:$0xff]
  %v242 = vld [vmem:[%s223 + $0x90] sm:$0x3f]
  %v244 = vsel %vm44, %v242, 0
  %246 = vmatprep.subr.mxu0 0.0
  %247 = vmatpush1.msra.mxu0 %v224
  %248 = vmatprep.subr.mxu0 0.0
  %249 = vmatpush1.msra.mxu0 %v225
  %250 = vmatprep.subr.mxu0 0.0
  %251 = vmatpush1.msra.mxu0 %v226
  %252 = vmatprep.subr.mxu0 0.0
  %253 = vmatpush1.msra.mxu0 %v227
  %254 = vmatprep.subr.mxu0 0.0
  %255 = vmatpush1.msra.mxu0 %v228
  %256 = vmatprep.subr.mxu0 0.0
  %257 = vmatpush1.msra.mxu0 %v229
  %258 = vmatprep.subr.mxu0 0.0
  %259 = vmatpush1.msra.mxu0 %v230
  %260 = vmatprep.subr.mxu0 0.0
  %261 = vmatpush1.msra.mxu0 %v231
  %262 = vmatprep.subr.mxu0 0.0
  %263 = vmatpush1.msra.mxu0 %v232
  %264 = vmatprep.subr.mxu0 0.0
  %265 = vmatpush1.msra.mxu0 %v233
  %266 = vmatprep.subr.mxu0 0.0
  %267 = vmatpush1.msra.mxu0 %v234
  %268 = vmatprep.subr.mxu0 0.0
  %269 = vmatpush1.msra.mxu0 %v235
  %270 = vmatprep.subr.mxu0 0.0
  %271 = vmatpush1.msra.mxu0 %v236
  %272 = vmatprep.subr.mxu0 0.0
  %273 = vmatpush1.msra.mxu0 %v237
  %274 = vmatprep.subr.mxu0 0.0
  %275 = vmatpush1.msra.mxu0 %v238
  %276 = vmatprep.subr.mxu0 0.0
  %277 = vmatpush1.msra.mxu0 %v239
  %278 = vmatprep.subr.mxu0 0.0
  %279 = vmatpush1.msra.mxu0 %v240
  %280 = vmatprep.subr.mxu0 0.0
  %281 = vmatpush1.msra.mxu0 %v241
  %282 = vmatprep.subr.mxu0 0.0
  %283 = vmatpush1.msra.mxu0 %v244
  %284 = vmatprep.subr.mxu0 0.0
  %285 = vmatpush1.msra.mxu0 0.0
  %286 = vmatprep.subr.mxu0 0.0
  %287 = vmatpush1.msra.mxu0 0.0
  %288 = vmatprep.subr.mxu0 0.0
  %289 = vmatpush1.msra.mxu0 0.0
  %290 = vmatprep.subr.mxu0 0.0
  %291 = vmatpush1.msra.mxu0 0.0
  %292 = vmatprep.subr.mxu0 0.0
  %293 = vmatpush1.msra.mxu0 0.0
  %294 = vmatprep.subr.mxu0 0.0
  %295 = vmatpush1.msra.mxu0 0.0
  %296 = vmatprep.subr.mxu0 0.0
  %297 = vmatpush1.msra.mxu0 0.0
  %298 = vmatprep.subr.mxu0 0.0
  %299 = vmatpush1.msra.mxu0 0.0
  %300 = vmatprep.subr.mxu0 0.0
  %301 = vmatpush1.msra.mxu0 0.0
  %302 = vmatprep.subr.mxu0 0.0
  %303 = vmatpush1.msra.mxu0 0.0
  %304 = vmatprep.subr.mxu0 0.0
  %305 = vmatpush1.msra.mxu0 0.0
  %306 = vmatprep.subr.mxu0 0.0
  %307 = vmatpush1.msra.mxu0 0.0
  %308 = vmatprep.subr.mxu0 0.0
  %309 = vmatpush1.msra.mxu0 0.0
  %310 = vmatprep.mubr.f32.mxu0 %v39
  %311 = vmatmul.mubr.f32.gmra.mrb[0].mxu0 %v14
  %v312 = vpop.f32.mrb[0].mxu0
  %v313 = vadd.f32 0.0, %v312
  %v314 = vpop.f32.mrb[0].mxu0
  %315 = vmatprep.mubr.f32.mxu0 %v42
  %316 = vmatmul.mubr.f32.gmra.mrb[0].mxu0 %v16
  %v317 = vpop.f32.mrb[0].mxu0
  %v318 = vadd.f32 0.0, %v317
  %v319 = vpop.f32.mrb[0].mxu0
  %320 = vdwg.mxu0
  %v321 = vmax.f32 %v221, %v313
  %v322 = vmax.f32 %v222, %v318
  %s323 = scalar_lea.vmem %s0, 456
  %v324 = vld [vmem:[%s323] sm:$0xff]
  %v325 = vld [vmem:[%s323 + $0x8] sm:$0xff]
  %v326 = vld [vmem:[%s323 + $0x10] sm:$0xff]
  %v327 = vld [vmem:[%s323 + $0x18] sm:$0xff]
  %v328 = vld [vmem:[%s323 + $0x20] sm:$0xff]
  %v329 = vld [vmem:[%s323 + $0x28] sm:$0xff]
  %v330 = vld [vmem:[%s323 + $0x30] sm:$0xff]
  %v331 = vld [vmem:[%s323 + $0x38] sm:$0xff]
  %v332 = vld [vmem:[%s323 + $0x40] sm:$0xff]
  %v333 = vld [vmem:[%s323 + $0x48] sm:$0xff]
  %v334 = vld [vmem:[%s323 + $0x50] sm:$0xff]
  %v335 = vld [vmem:[%s323 + $0x58] sm:$0xff]
  %v336 = vld [vmem:[%s323 + $0x60] sm:$0xff]
  %v337 = vld [vmem:[%s323 + $0x68] sm:$0xff]
  %v338 = vld [vmem:[%s323 + $0x70] sm:$0xff]
  %v339 = vld [vmem:[%s323 + $0x78] sm:$0xff]
  %v340 = vld [vmem:[%s323 + $0x80] sm:$0xff]
  %v341 = vld [vmem:[%s323 + $0x88] sm:$0xff]
  %v342 = vld [vmem:[%s323 + $0x90] sm:$0x3f]
  %v344 = vsel %vm44, %v342, 0
  %346 = vmatprep.subr.mxu0 0.0
  %347 = vmatpush1.msra.mxu0 %v324
  %348 = vmatprep.subr.mxu0 0.0
  %349 = vmatpush1.msra.mxu0 %v325
  %350 = vmatprep.subr.mxu0 0.0
  %351 = vmatpush1.msra.mxu0 %v326
  %352 = vmatprep.subr.mxu0 0.0
  %353 = vmatpush1.msra.mxu0 %v327
  %354 = vmatprep.subr.mxu0 0.0
  %355 = vmatpush1.msra.mxu0 %v328
  %356 = vmatprep.subr.mxu0 0.0
  %357 = vmatpush1.msra.mxu0 %v329
  %358 = vmatprep.subr.mxu0 0.0
  %359 = vmatpush1.msra.mxu0 %v330
  %360 = vmatprep.subr.mxu0 0.0
  %361 = vmatpush1.msra.mxu0 %v331
  %362 = vmatprep.subr.mxu0 0.0
  %363 = vmatpush1.msra.mxu0 %v332
  %364 = vmatprep.subr.mxu0 0.0
  %365 = vmatpush1.msra.mxu0 %v333
  %366 = vmatprep.subr.mxu0 0.0
  %367 = vmatpush1.msra.mxu0 %v334
  %368 = vmatprep.subr.mxu0 0.0
  %369 = vmatpush1.msra.mxu0 %v335
  %370 = vmatprep.subr.mxu0 0.0
  %371 = vmatpush1.msra.mxu0 %v336
  %372 = vmatprep.subr.mxu0 0.0
  %373 = vmatpush1.msra.mxu0 %v337
  %374 = vmatprep.subr.mxu0 0.0
  %375 = vmatpush1.msra.mxu0 %v338
  %376 = vmatprep.subr.mxu0 0.0
  %377 = vmatpush1.msra.mxu0 %v339
  %378 = vmatprep.subr.mxu0 0.0
  %379 = vmatpush1.msra.mxu0 %v340
  %380 = vmatprep.subr.mxu0 0.0
  %381 = vmatpush1.msra.mxu0 %v341
  %382 = vmatprep.subr.mxu0 0.0
  %383 = vmatpush1.msra.mxu0 %v344
  %384 = vmatprep.subr.mxu0 0.0
  %385 = vmatpush1.msra.mxu0 0.0
  %386 = vmatprep.subr.mxu0 0.0
  %387 = vmatpush1.msra.mxu0 0.0
  %388 = vmatprep.subr.mxu0 0.0
  %389 = vmatpush1.msra.mxu0 0.0
  %390 = vmatprep.subr.mxu0 0.0
  %391 = vmatpush1.msra.mxu0 0.0
  %392 = vmatprep.subr.mxu0 0.0
  %393 = vmatpush1.msra.mxu0 0.0
  %394 = vmatprep.subr.mxu0 0.0
  %395 = vmatpush1.msra.mxu0 0.0
  %396 = vmatprep.subr.mxu0 0.0
  %397 = vmatpush1.msra.mxu0 0.0
  %398 = vmatprep.subr.mxu0 0.0
  %399 = vmatpush1.msra.mxu0 0.0
  %400 = vmatprep.subr.mxu0 0.0
  %401 = vmatpush1.msra.mxu0 0.0
  %402 = vmatprep.subr.mxu0 0.0
  %403 = vmatpush1.msra.mxu0 0.0
  %404 = vmatprep.subr.mxu0 0.0
  %405 = vmatpush1.msra.mxu0 0.0
  %406 = vmatprep.subr.mxu0 0.0
  %407 = vmatpush1.msra.mxu0 0.0
  %408 = vmatprep.subr.mxu0 0.0
  %409 = vmatpush1.msra.mxu0 0.0
  %410 = vmatprep.mubr.f32.mxu0 %v39
  %411 = vmatmul.mubr.f32.gmra.mrb[0].mxu0 %v14
  %v412 = vpop.f32.mrb[0].mxu0
  %v413 = vadd.f32 0.0, %v412
  %v414 = vpop.f32.mrb[0].mxu0
  %415 = vmatprep.mubr.f32.mxu0 %v42
  %416 = vmatmul.mubr.f32.gmra.mrb[0].mxu0 %v16
  %v417 = vpop.f32.mrb[0].mxu0
  %v418 = vadd.f32 0.0, %v417
  %v419 = vpop.f32.mrb[0].mxu0
  %420 = vdwg.mxu0
  %v421 = vmax.f32 %v321, %v413
  %v422 = vmax.f32 %v322, %v418
  %v423 = vld [vmem:[%s2] sm:$0xff]
  %v424 = vld [vmem:[%s2 + $0x8] sm:$0xff]
  %426 = vset.pattern.permute.xlu0 0
  %427 = vperm.xlu0 %426, %v423
  %v428 = vpop.permute.xlu0 %427
  %431 = vset.pattern.permute.xlu0 0
  %432 = vperm.xlu0 %431, %v424
  %v433 = vpop.permute.xlu0 %432
  %v435 = vadd.f32 %v421, %v428
  %v436 = vadd.f32 %v422, %v433
  %v437 = vmax.f32 %v435, 0.0
  %v438 = vmax.f32 %v436, 0.0
  %vm439 = vcmask 261120
  %440 = vst.msk [vmem:[%s3] sm:$0xff] %vm439, %v437
  %441 = vst.msk [vmem:[%s3 + $0x8] sm:$0xff] %vm439, %v438
  // Predicated region
  $region14: #{lenet5_forward.4} parent=0 // pred_check
    _
  $region15: #{lenet5_forward.4} parent=0 // pred_check_branch
    %443 = sbr.rel (0) target = $region17
  $region16: #{lenet5_forward.4} parent=0 // pred_region
    _
  $region17: #{lenet5_forward.4} parent=0 // pred_fallthru
    _
  // Predicated region
  $region18: #{lenet5_forward.4} parent=0 // pred_check
    _
  $region19: #{lenet5_forward.4} parent=0 // pred_check_branch
    %445 = sbr.rel (0) target = $region21
  $region20: #{lenet5_forward.4} parent=0 // pred_region
    _
  $region21: #{lenet5_forward.4} parent=0 // pred_fallthru
    _

// kernel: lenet5_forward.5
$region0: #{lenet5_forward.5}
  #allocation0 [shape = 'u32[]', space=smem, size = 0x4, offset = 0x4, fixed_abs, tag = 'smem constant byte address 0x4 - core index']
  #allocation1 [shape = 'u32[144,128]{1,0:T(1,128)}', space=vmem, size = 0x12000, scoped, tag = 'internal scratch']
  %s0 = inlined_call_operand.vmem [shape: f32[2,256], index: 0, kind: input, shape index: {}]
  %s1 = inlined_call_operand.vmem [shape: f32[256,120], index: 1, kind: input, shape index: {}]
  %s2 = inlined_call_operand.vmem [shape: f32[1,120], index: 2, kind: input, shape index: {}]
  %s3 = inlined_call_operand.vmem [shape: f32[120,84], index: 3, kind: input, shape index: {}]
  %s4 = inlined_call_operand.vmem [shape: f32[1,84], index: 4, kind: input, shape index: {}]
  %s5 = inlined_call_operand.vmem [shape: f32[84,10], index: 5, kind: input, shape index: {}]
  %s6 = inlined_call_operand.vmem [shape: f32[1,10], index: 6, kind: input, shape index: {}]
  %s7 = inlined_call_operand.hbm [shape: f32[2,10], index: 7, kind: output, shape index: {}]
  %s8 = sld [smem:[#allocation0]]
  $region38: #{lenet5_forward.5} parent=0
    _
  %s10 = ssub.s32 1, %s8
  %s11 = scalar_select 0, %s10, %s8
  $region1: #{lenet5_forward.5} parent=0
    #allocation2 [shape = 'u8[1024]{0}', space=vmem, size = 0x400, scoped, tag = 'output window, operand 0, single buffered']
    #allocation3 [shape = 's32[1]{0}', space=sflag, size = 0x4, scoped, tag = 'scoped memory for lenet5_forward.5']
    %12 = vsyncpa [#allocation3], 0
    // Predicated region
    $region2: #{lenet5_forward.5} parent=1 // pred_check
      _
    $region3: #{lenet5_forward.5} parent=1 // pred_check_branch
      %14 = sbr.rel (0) target = $region5
    $region4: #{lenet5_forward.5} parent=1 // pred_region
      _
    $region5: #{lenet5_forward.5} parent=1 // pred_fallthru
      _
    // Predicated region
    $region6: #{lenet5_forward.5} parent=1 // pred_check
      _
    $region7: #{lenet5_forward.5} parent=1 // pred_check_branch
      %16 = sbr.rel (0) target = $region9
    $region8: #{lenet5_forward.5} parent=1 // pred_region
      _
    $region9: #{lenet5_forward.5} parent=1 // pred_fallthru
      _
    // Predicated region
    $region10: #{lenet5_forward.5} parent=1 // pred_check
      _
    $region11: #{lenet5_forward.5} parent=1 // pred_check_branch
      %18 = sbr.rel (0) target = $region13
    $region12: #{lenet5_forward.5} parent=1 // pred_region
      _
    $region13: #{lenet5_forward.5} parent=1 // pred_fallthru
      _
    // Predicated region
    $region14: #{lenet5_forward.5} parent=1 // pred_check
      _
    $region15: #{lenet5_forward.5} parent=1 // pred_check_branch
      %20 = sbr.rel (0) target = $region17
    $region16: #{lenet5_forward.5} parent=1 // pred_region
      _
    $region17: #{lenet5_forward.5} parent=1 // pred_fallthru
      _
    // Predicated region
    $region18: #{lenet5_forward.5} parent=1 // pred_check
      _
    $region19: #{lenet5_forward.5} parent=1 // pred_check_branch
      %22 = sbr.rel (0) target = $region21
    $region20: #{lenet5_forward.5} parent=1 // pred_region
      _
    $region21: #{lenet5_forward.5} parent=1 // pred_fallthru
      _
    // Predicated region
    $region22: #{lenet5_forward.5} parent=1 // pred_check
      _
    $region23: #{lenet5_forward.5} parent=1 // pred_check_branch
      %24 = sbr.rel (0) target = $region25
    $region24: #{lenet5_forward.5} parent=1 // pred_region
      _
    $region25: #{lenet5_forward.5} parent=1 // pred_fallthru
      _
    // Predicated region
    $region26: #{lenet5_forward.5} parent=1 // pred_check
      _
    $region27: #{lenet5_forward.5} parent=1 // pred_check_branch
      %26 = sbr.rel (0) target = $region29
    $region28: #{lenet5_forward.5} parent=1 // pred_region
      _
    $region29: #{lenet5_forward.5} parent=1 // pred_fallthru
      _
    %v27 = vld [vmem:[%s0] sm:$0xf]
    %v28 = vld [vmem:[%s1] sm:$0xff]
    %v29 = vld [vmem:[%s1 + $0x8] sm:$0xff]
    %v30 = vld [vmem:[%s1 + $0x10] sm:$0xff]
    %v31 = vld [vmem:[%s1 + $0x18] sm:$0xff]
    %v32 = vld [vmem:[%s1 + $0x20] sm:$0xff]
    %v33 = vld [vmem:[%s1 + $0x28] sm:$0xff]
    %v34 = vld [vmem:[%s1 + $0x30] sm:$0xff]
    %v35 = vld [vmem:[%s1 + $0x38] sm:$0xff]
    %v36 = vld [vmem:[%s1 + $0x40] sm:$0xff]
    %v37 = vld [vmem:[%s1 + $0x48] sm:$0xff]
    %v38 = vld [vmem:[%s1 + $0x50] sm:$0xff]
    %v39 = vld [vmem:[%s1 + $0x58] sm:$0xff]
    %v40 = vld [vmem:[%s1 + $0x60] sm:$0xff]
    %v41 = vld [vmem:[%s1 + $0x68] sm:$0xff]
    %v42 = vld [vmem:[%s1 + $0x70] sm:$0xff]
    %v43 = vld [vmem:[%s1 + $0x78] sm:$0xff]
    %v44 = vld [vmem:[%s1 + $0x80] sm:$0xff]
    %v45 = vld [vmem:[%s1 + $0x88] sm:$0xff]
    %v46 = vld [vmem:[%s1 + $0x90] sm:$0xff]
    %v47 = vld [vmem:[%s1 + $0x98] sm:$0xff]
    %v48 = vld [vmem:[%s1 + $0xa0] sm:$0xff]
    %v49 = vld [vmem:[%s1 + $0xa8] sm:$0xff]
    %v50 = vld [vmem:[%s1 + $0xb0] sm:$0xff]
    %v51 = vld [vmem:[%s1 + $0xb8] sm:$0xff]
    %v52 = vld [vmem:[%s1 + $0xc0] sm:$0xff]
    %v53 = vld [vmem:[%s1 + $0xc8] sm:$0xff]
    %v54 = vld [vmem:[%s1 + $0xd0] sm:$0xff]
    %v55 = vld [vmem:[%s1 + $0xd8] sm:$0xff]
    %v56 = vld [vmem:[%s1 + $0xe0] sm:$0xff]
    %v57 = vld [vmem:[%s1 + $0xe8] sm:$0xff]
    %v58 = vld [vmem:[%s1 + $0xf0] sm:$0xff]
    %v59 = vld [vmem:[%s1 + $0xf8] sm:$0xff]
    %v60 = vld [vmem:[%s2] sm:$0x1]
    %v62 = vlaneseq
    %v63 = vshrl.u32 %v62, 7
    %v64 = vsub.s32 0, %v63
    %v65 = vrot.slane %v60, %v64
    %v69 = vunpack.c.l.s4 1983009808
    %v70 = vunpack.c.0.s8 %v69
    %v71 = vlaneseq
    %v72 = vshrl.u32 %v71, 7
    %v73 = vsub.s32 %v70, %v72
    %v74 = vrot.slane %v27, %v73
    %v75 = vcombine.high %v74, %v74
    %78 = vmatprep.subr.mxu0 0.0
    %79 = vmatpush1.msra.mxu0 %v28
    %80 = vmatprep.subr.mxu0 0.0
    %81 = vmatpush1.msra.mxu0 %v29
    %82 = vmatprep.subr.mxu0 0.0
    %83 = vmatpush1.msra.mxu0 %v30
    %84 = vmatprep.subr.mxu0 0.0
    %85 = vmatpush1.msra.mxu0 %v31
    %86 = vmatprep.subr.mxu0 0.0
    %87 = vmatpush1.msra.mxu0 %v32
    %88 = vmatprep.subr.mxu0 0.0
    %89 = vmatpush1.msra.mxu0 %v33
    %90 = vmatprep.subr.mxu0 0.0
    %91 = vmatpush1.msra.mxu0 %v34
    %92 = vmatprep.subr.mxu0 0.0
    %93 = vmatpush1.msra.mxu0 %v35
    %94 = vmatprep.subr.mxu0 0.0
    %95 = vmatpush1.msra.mxu0 %v36
    %96 = vmatprep.subr.mxu0 0.0
    %97 = vmatpush1.msra.mxu0 %v37
    %98 = vmatprep.subr.mxu0 0.0
    %99 = vmatpush1.msra.mxu0 %v38
    %100 = vmatprep.subr.mxu0 0.0
    %101 = vmatpush1.msra.mxu0 %v39
    %102 = vmatprep.subr.mxu0 0.0
    %103 = vmatpush1.msra.mxu0 %v40
    %104 = vmatprep.subr.mxu0 0.0
    %105 = vmatpush1.msra.mxu0 %v41
    %106 = vmatprep.subr.mxu0 0.0
    %107 = vmatpush1.msra.mxu0 %v42
    %108 = vmatprep.subr.mxu0 0.0
    %109 = vmatpush1.msra.mxu0 %v43
    %110 = vmatprep.subr.mxu0 0.0
    %111 = vmatpush1.msra.mxu0 %v44
    %112 = vmatprep.subr.mxu0 0.0
    %113 = vmatpush1.msra.mxu0 %v45
    %114 = vmatprep.subr.mxu0 0.0
    %115 = vmatpush1.msra.mxu0 %v46
    %116 = vmatprep.subr.mxu0 0.0
    %117 = vmatpush1.msra.mxu0 %v47
    %118 = vmatprep.subr.mxu0 0.0
    %119 = vmatpush1.msra.mxu0 %v48
    %120 = vmatprep.subr.mxu0 0.0
    %121 = vmatpush1.msra.mxu0 %v49
    %122 = vmatprep.subr.mxu0 0.0
    %123 = vmatpush1.msra.mxu0 %v50
    %124 = vmatprep.subr.mxu0 0.0
    %125 = vmatpush1.msra.mxu0 %v51
    %126 = vmatprep.subr.mxu0 0.0
    %127 = vmatpush1.msra.mxu0 %v52
    %128 = vmatprep.subr.mxu0 0.0
    %129 = vmatpush1.msra.mxu0 %v53
    %130 = vmatprep.subr.mxu0 0.0
    %131 = vmatpush1.msra.mxu0 %v54
    %132 = vmatprep.subr.mxu0 0.0
    %133 = vmatpush1.msra.mxu0 %v55
    %134 = vmatprep.subr.mxu0 0.0
    %135 = vmatpush1.msra.mxu0 %v56
    %136 = vmatprep.subr.mxu0 0.0
    %137 = vmatpush1.msra.mxu0 %v57
    %138 = vmatprep.subr.mxu0 0.0
    %139 = vmatpush1.msra.mxu0 %v58
    %140 = vmatprep.subr.mxu0 0.0
    %141 = vmatpush1.msra.mxu0 %v59
    %142 = vmatprep.mubr.f32.mxu0 %v75
    %143 = vmatmul.mubr.f32.gmra.mrb[0].mxu0 %v74
    %v144 = vpop.f32.mrb[0].mxu0
    %v145 = vadd.f32 %v65, %v144
    %v146 = vpop.f32.mrb[0].mxu0
    %147 = vdwg.mxu0
    %v148 = vmax.f32 %v145, 0.0
    %v149 = vld [vmem:[%s3] sm:$0xff]
    %v150 = vld [vmem:[%s3 + $0x8] sm:$0xff]
    %v151 = vld [vmem:[%s3 + $0x10] sm:$0xff]
    %v152 = vld [vmem:[%s3 + $0x18] sm:$0xff]
    %v153 = vld [vmem:[%s3 + $0x20] sm:$0xff]
    %v154 = vld [vmem:[%s3 + $0x28] sm:$0xff]
    %v155 = vld [vmem:[%s3 + $0x30] sm:$0xff]
    %v156 = vld [vmem:[%s3 + $0x38] sm:$0xff]
    %v157 = vld [vmem:[%s3 + $0x40] sm:$0xff]
    %v158 = vld [vmem:[%s3 + $0x48] sm:$0xff]
    %v159 = vld [vmem:[%s3 + $0x50] sm:$0xff]
    %v160 = vld [vmem:[%s3 + $0x58] sm:$0xff]
    %v161 = vld [vmem:[%s3 + $0x60] sm:$0xff]
    %v162 = vld [vmem:[%s3 + $0x68] sm:$0xff]
    %v163 = vld [vmem:[%s3 + $0x70] sm:$0xff]
    %v164 = vld [vmem:[%s4] sm:$0x1]
    %v166 = vlaneseq
    %v167 = vshrl.u32 %v166, 7
    %v168 = vsub.s32 0, %v167
    %v169 = vrot.slane %v164, %v168
    %vm171 = vcmask 982016
    %v173 = vsel %vm171, %v148, 0
    %175 = vmatprep.subr.mxu0 0.0
    %176 = vmatpush1.msra.mxu0 %v149
    %177 = vmatprep.subr.mxu0 0.0
    %178 = vmatpush1.msra.mxu0 %v150
    %179 = vmatprep.subr.mxu0 0.0
    %180 = vmatpush1.msra.mxu0 %v151
    %181 = vmatprep.subr.mxu0 0.0
    %182 = vmatpush1.msra.mxu0 %v152
    %183 = vmatprep.subr.mxu0 0.0
    %184 = vmatpush1.msra.mxu0 %v153
    %185 = vmatprep.subr.mxu0 0.0
    %186 = vmatpush1.msra.mxu0 %v154
    %187 = vmatprep.subr.mxu0 0.0
    %188 = vmatpush1.msra.mxu0 %v155
    %189 = vmatprep.subr.mxu0 0.0
    %190 = vmatpush1.msra.mxu0 %v156
    %191 = vmatprep.subr.mxu0 0.0
    %192 = vmatpush1.msra.mxu0 %v157
    %193 = vmatprep.subr.mxu0 0.0
    %194 = vmatpush1.msra.mxu0 %v158
    %195 = vmatprep.subr.mxu0 0.0
    %196 = vmatpush1.msra.mxu0 %v159
    %197 = vmatprep.subr.mxu0 0.0
    %198 = vmatpush1.msra.mxu0 %v160
    %199 = vmatprep.subr.mxu0 0.0
    %200 = vmatpush1.msra.mxu0 %v161
    %201 = vmatprep.subr.mxu0 0.0
    %202 = vmatpush1.msra.mxu0 %v162
    %203 = vmatprep.subr.mxu0 0.0
    %204 = vmatpush1.msra.mxu0 %v163
    %205 = vmatprep.subr.mxu0 0.0
    %206 = vmatpush1.msra.mxu0 0.0
    %207 = vmatprep.subr.mxu0 0.0
    %208 = vmatpush1.msra.mxu0 0.0
    %209 = vmatprep.subr.mxu0 0.0
    %210 = vmatpush1.msra.mxu0 0.0
    %211 = vmatprep.subr.mxu0 0.0
    %212 = vmatpush1.msra.mxu0 0.0
    %213 = vmatprep.subr.mxu0 0.0
    %214 = vmatpush1.msra.mxu0 0.0
    %215 = vmatprep.subr.mxu0 0.0
    %216 = vmatpush1.msra.mxu0 0.0
    %217 = vmatprep.subr.mxu0 0.0
    %218 = vmatpush1.msra.mxu0 0.0
    %219 = vmatprep.subr.mxu0 0.0
    %220 = vmatpush1.msra.mxu0 0.0
    %221 = vmatprep.subr.mxu0 0.0
    %222 = vmatpush1.msra.mxu0 0.0
    %223 = vmatprep.subr.mxu0 0.0
    %224 = vmatpush1.msra.mxu0 0.0
    %225 = vmatprep.subr.mxu0 0.0
    %226 = vmatpush1.msra.mxu0 0.0
    %227 = vmatprep.subr.mxu0 0.0
    %228 = vmatpush1.msra.mxu0 0.0
    %229 = vmatprep.subr.mxu0 0.0
    %230 = vmatpush1.msra.mxu0 0.0
    %231 = vmatprep.subr.mxu0 0.0
    %232 = vmatpush1.msra.mxu0 0.0
    %233 = vmatprep.subr.mxu0 0.0
    %234 = vmatpush1.msra.mxu0 0.0
    %235 = vmatprep.subr.mxu0 0.0
    %236 = vmatpush1.msra.mxu0 0.0
    %237 = vmatprep.subr.mxu0 0.0
    %238 = vmatpush1.msra.mxu0 0.0
    %239 = vmatprep.mubr.f32.mxu0 0.0
    %240 = vmatmul.mubr.f32.gmra.mrb[0].mxu0 %v173
    %v241 = vpop.f32.mrb[0].mxu0
    %v242 = vadd.f32 %v169, %v241
    %v243 = vpop.f32.mrb[0].mxu0
    %244 = vdwg.mxu0
    %v245 = vmax.f32 %v242, 0.0
    %v246 = vld [vmem:[%s5] sm:$0xff]
    %v247 = vld [vmem:[%s5 + $0x8] sm:$0xff]
    %v248 = vld [vmem:[%s5 + $0x10] sm:$0xff]
    %v249 = vld [vmem:[%s5 + $0x18] sm:$0xff]
    %v250 = vld [vmem:[%s5 + $0x20] sm:$0xff]
    %v251 = vld [vmem:[%s5 + $0x28] sm:$0xff]
    %v252 = vld [vmem:[%s5 + $0x30] sm:$0xff]
    %v253 = vld [vmem:[%s5 + $0x38] sm:$0xff]
    %v254 = vld [vmem:[%s5 + $0x40] sm:$0xff]
    %v255 = vld [vmem:[%s5 + $0x48] sm:$0xff]
    %v256 = vld [vmem:[%s5 + $0x50] sm:$0xf]
    %v257 = vld [vmem:[%s6] sm:$0x1]
    %v259 = vlaneseq
    %v260 = vshrl.u32 %v259, 7
    %v261 = vsub.s32 0, %v260
    %v262 = vrot.slane %v257, %v261
    %vm264 = vcmask 687104
    %v266 = vsel %vm264, %v245, 0
    %vm268 = vcmask 1043456
    %v270 = vsel %vm268, %v256, 0
    %272 = vmatprep.subr.mxu0 0.0
    %273 = vmatpush1.msra.mxu0 %v246
    %274 = vmatprep.subr.mxu0 0.0
    %275 = vmatpush1.msra.mxu0 %v247
    %276 = vmatprep.subr.mxu0 0.0
    %277 = vmatpush1.msra.mxu0 %v248
    %278 = vmatprep.subr.mxu0 0.0
    %279 = vmatpush1.msra.mxu0 %v249
    %280 = vmatprep.subr.mxu0 0.0
    %281 = vmatpush1.msra.mxu0 %v250
    %282 = vmatprep.subr.mxu0 0.0
    %283 = vmatpush1.msra.mxu0 %v251
    %284 = vmatprep.subr.mxu0 0.0
    %285 = vmatpush1.msra.mxu0 %v252
    %286 = vmatprep.subr.mxu0 0.0
    %287 = vmatpush1.msra.mxu0 %v253
    %288 = vmatprep.subr.mxu0 0.0
    %289 = vmatpush1.msra.mxu0 %v254
    %290 = vmatprep.subr.mxu0 0.0
    %291 = vmatpush1.msra.mxu0 %v255
    %292 = vmatprep.subr.mxu0 0.0
    %293 = vmatpush1.msra.mxu0 %v270
    %294 = vmatprep.subr.mxu0 0.0
    %295 = vmatpush1.msra.mxu0 0.0
    %296 = vmatprep.subr.mxu0 0.0
    %297 = vmatpush1.msra.mxu0 0.0
    %298 = vmatprep.subr.mxu0 0.0
    %299 = vmatpush1.msra.mxu0 0.0
    %300 = vmatprep.subr.mxu0 0.0
    %301 = vmatpush1.msra.mxu0 0.0
    %302 = vmatprep.subr.mxu0 0.0
    %303 = vmatpush1.msra.mxu0 0.0
    %304 = vmatprep.subr.mxu0 0.0
    %305 = vmatpush1.msra.mxu0 0.0
    %306 = vmatprep.subr.mxu0 0.0
    %307 = vmatpush1.msra.mxu0 0.0
    %308 = vmatprep.subr.mxu0 0.0
    %309 = vmatpush1.msra.mxu0 0.0
    %310 = vmatprep.subr.mxu0 0.0
    %311 = vmatpush1.msra.mxu0 0.0
    %312 = vmatprep.subr.mxu0 0.0
    %313 = vmatpush1.msra.mxu0 0.0
    %314 = vmatprep.subr.mxu0 0.0
    %315 = vmatpush1.msra.mxu0 0.0
    %316 = vmatprep.subr.mxu0 0.0
    %317 = vmatpush1.msra.mxu0 0.0
    %318 = vmatprep.subr.mxu0 0.0
    %319 = vmatpush1.msra.mxu0 0.0
    %320 = vmatprep.subr.mxu0 0.0
    %321 = vmatpush1.msra.mxu0 0.0
    %322 = vmatprep.subr.mxu0 0.0
    %323 = vmatpush1.msra.mxu0 0.0
    %324 = vmatprep.subr.mxu0 0.0
    %325 = vmatpush1.msra.mxu0 0.0
    %326 = vmatprep.subr.mxu0 0.0
    %327 = vmatpush1.msra.mxu0 0.0
    %328 = vmatprep.subr.mxu0 0.0
    %329 = vmatpush1.msra.mxu0 0.0
    %330 = vmatprep.subr.mxu0 0.0
    %331 = vmatpush1.msra.mxu0 0.0
    %332 = vmatprep.subr.mxu0 0.0
    %333 = vmatpush1.msra.mxu0 0.0
    %334 = vmatprep.subr.mxu0 0.0
    %335 = vmatpush1.msra.mxu0 0.0
    %336 = vmatprep.mubr.f32.mxu0 0.0
    %337 = vmatmul.mubr.f32.gmra.mrb[0].mxu0 %v266
    %v338 = vpop.f32.mrb[0].mxu0
    %v339 = vadd.f32 %v262, %v338
    %v340 = vpop.f32.mrb[0].mxu0
    %341 = vdwg.mxu0
    %vm342 = vcmask 74752
    %343 = vst.msk [vmem:[#allocation2] sm:$0x3] %vm342, %v339
    // Predicated region
    $region30: #{lenet5_forward.5} parent=1 // pred_check
      _
    $region31: #{lenet5_forward.5} parent=1 // pred_check_branch
      %345 = sbr.rel (0) target = $region33
    $region32: #{lenet5_forward.5} parent=1 // pred_region
      %s347 = ssub.s32 32, 32
      %348 = vsyncadd [#allocation3], %s347
      %s350 = sshll.u32 [#allocation2], 4
      %s351 = int_to_ptr.vmem [resolvable:$true] %s350
      %353 = dma.vmem_to_hbm [thread:$0]  %s351, 32, %s7, [#allocation3]
    $region33: #{lenet5_forward.5} parent=1 // pred_fallthru
      _
    // Predicated region
    $region34: #{lenet5_forward.5} parent=1 // pred_check
      _
    $region35: #{lenet5_forward.5} parent=1 // pred_check_branch
      %355 = sbr.rel (0) target = $region37
    $region36: #{lenet5_forward.5} parent=1 // pred_region
      %356 = dma.done [#allocation3], 32
    $region37: #{lenet5_forward.5} parent=1 // pred_fallthru
      _
    %357 = vsyncpa [#allocation3], 1

</llo_original>
